<compile_context>
chip_gen: v6e
topology: v6e:2x2x1
jax: 0.10.0
libtpu: 0.0.40
codegen_flags: <defaults>
</compile_context>

<pallas_src>
import functools

import jax
import jax.numpy as jnp
from jax import lax
from jax.experimental import pallas as pl
from jax.experimental.pallas import tpu as pltpu


def _head_flash_kernel(xq_ref, xkv_ref, wq_ref, wkv_ref, o_ref,
                       q_sc, m_sc, l_sc, acc_sc,
                       *, scale, head_size, block_q, block_kv):
    # xq_ref:  (1, block_q,  C)    xkv_ref: (1, block_kv, C)
    # wq_ref:  (C, H)              wkv_ref: (C, 2H)
    # o_ref:   (1, block_q,  H)
    # q_sc:    (block_q, H) f32    m_sc/l_sc: (block_q, 1) f32   acc_sc: (block_q, H) f32
    qi = pl.program_id(1)
    ki = pl.program_id(2)

    q_start = qi * block_q
    kv_start = ki * block_kv

    @pl.when(ki == 0)
    def _init():
        xq = xq_ref[0]                                                    # (tq, C)
        q = jnp.dot(xq, wq_ref[...], preferred_element_type=jnp.float32)  # (tq, H)
        q_sc[...] = q * scale            # fold C**-0.5 into q (not the TxT scores)
        m_sc[...] = jnp.full_like(m_sc, -jnp.inf)
        l_sc[...] = jnp.zeros_like(l_sc)
        acc_sc[...] = jnp.zeros_like(acc_sc)

    # Causal skip: if the whole kv tile lies strictly past the last query row of
    # this q tile, every score is masked -> skip the tile entirely.
    @pl.when(kv_start < q_start + block_q)
    def _tile():
        xkv = xkv_ref[0]                                                  # (tkv, C)
        kv = jnp.dot(xkv, wkv_ref[...],
                     preferred_element_type=jnp.float32)                  # (tkv, 2H)
        k = kv[:, :head_size]
        v = kv[:, head_size:]

        # Contract the head axis of q and k directly (no explicit k.T).
        s = lax.dot_general(q_sc[...], k, (((1,), (1,)), ((), ())),
                            preferred_element_type=jnp.float32)           # (tq, tkv)

        # Per-tile causal mask with global row/col offsets.
        row = q_start + lax.broadcasted_iota(jnp.int32, s.shape, 0)
        col = kv_start + lax.broadcasted_iota(jnp.int32, s.shape, 1)
        s = jnp.where(col <= row, s, -jnp.inf)

        # Online softmax update (f32 throughout).
        m_prev = m_sc[...]
        m_new = jnp.maximum(m_prev, jnp.max(s, axis=-1, keepdims=True))
        alpha = jnp.exp(m_prev - m_new)
        p = jnp.exp(s - m_new)
        l_sc[...] = alpha * l_sc[...] + jnp.sum(p, axis=-1, keepdims=True)
        acc_sc[...] = alpha * acc_sc[...] + jnp.dot(
            p, v, preferred_element_type=jnp.float32)
        m_sc[...] = m_new

    @pl.when(ki == pl.num_programs(2) - 1)
    def _finalize():
        inv_l = pl.reciprocal(l_sc[...], approx=True)   # EUP slot, essentially free
        o_ref[0] = (acc_sc[...] * inv_l).astype(o_ref.dtype)


def head_forward(x, wq, wk, wv, *, block_q=128, block_kv=128):
    """x: (B, T, C).  wq/wk/wv: (C, H) (pre-transposed nn.Linear weights).

    Returns (B, T, H). Works with f32 or bf16 inputs (accumulation is f32)."""
    B, T, C = x.shape
    H = wq.shape[1]

    block_q = min(block_q, T)
    block_kv = min(block_kv, T)
    assert T % block_q == 0 and T % block_kv == 0, (T, block_q, block_kv)
    assert block_q == T or block_q % 8 == 0
    assert block_kv == T or block_kv % 8 == 0

    # Fuse the K and V projections into one lane-wider matmul; Q stays separate
    # because it is computed per q tile rather than per kv tile.
    wkv = jnp.concatenate([wk, wv], axis=1)                 # (C, 2H)

    scale = float(C) ** -0.5
    grid = (B, T // block_q, T // block_kv)

    kernel = functools.partial(
        _head_flash_kernel, scale=scale, head_size=H,
        block_q=block_q, block_kv=block_kv)

    itemsize = x.dtype.itemsize
    cost = pl.CostEstimate(
        flops=2 * B * T * C * 3 * H + 4 * B * T * T * H,    # qkv proj + QK^T + PV
        transcendentals=B * T * T,                           # exp (upper bound)
        bytes_accessed=(2 * x.size + wq.size + wkv.size + B * T * H) * itemsize,
    )

    return pl.pallas_call(
        kernel,
        out_shape=jax.ShapeDtypeStruct((B, T, H), x.dtype),
        grid_spec=pltpu.PrefetchScalarGridSpec(
            num_scalar_prefetch=0,
            grid=grid,
            in_specs=[
                pl.BlockSpec((1, block_q, C), lambda b, qi, ki: (b, qi, 0)),   # x (q rows)
                pl.BlockSpec((1, block_kv, C), lambda b, qi, ki: (b, ki, 0)),  # x (kv rows)
                pl.BlockSpec((C, H), lambda b, qi, ki: (0, 0)),                # Wq
                pl.BlockSpec((C, 2 * H), lambda b, qi, ki: (0, 0)),            # Wk|Wv
            ],
            out_specs=pl.BlockSpec((1, block_q, H), lambda b, qi, ki: (b, qi, 0)),
            scratch_shapes=[
                pltpu.VMEM((block_q, H), jnp.float32),   # q (scaled)
                pltpu.VMEM((block_q, 1), jnp.float32),   # running max
                pltpu.VMEM((block_q, 1), jnp.float32),   # running sum
                pltpu.VMEM((block_q, H), jnp.float32),   # output accumulator
            ],
        ),
        compiler_params=pltpu.CompilerParams(
            dimension_semantics=("parallel", "parallel", "arbitrary"),
        ),
        cost_estimate=cost,
    )(x, x, wq, wkv)


def head_reference(x, wq, wk, wv):
    """Pure-JAX reference mirroring the PyTorch forward."""
    B, T, C = x.shape
    q = x @ wq
    k = x @ wk
    v = x @ wv
    wei = jnp.einsum("btd,bsd->bts", q, k) * (float(C) ** -0.5)
    mask = jnp.tril(jnp.ones((T, T), dtype=bool))
    wei = jnp.where(mask, wei, -jnp.inf)
    wei = jax.nn.softmax(wei, axis=-1)
    return jnp.einsum("bts,bsh->bth", wei, v)


if __name__ == "__main__":
    # Small shapes consistent with the module: n_embd=128 (module default),
    # head_size=16, B=2, T=128.  block_q=block_kv=64 exercises the multi-tile
    # flash path and the causal tile-skip.
    B, T, C, H = 2, 128, 128, 16

    key = jax.random.PRNGKey(0)
    kx, kq, kk, kv = jax.random.split(key, 4)

    x = jax.random.normal(kx, (B, T, C), dtype=jnp.float32)
    # nn.Linear(n_embd, head_size, bias=False) weights, stored pre-transposed (C, H).
    wq = jax.random.normal(kq, (C, H), dtype=jnp.float32) * (C ** -0.5)
    wk = jax.random.normal(kk, (C, H), dtype=jnp.float32) * (C ** -0.5)
    wv = jax.random.normal(kv, (C, H), dtype=jnp.float32) * (C ** -0.5)

    out = head_forward(x, wq, wk, wv, block_q=64, block_kv=64)
    out = jax.block_until_ready(out)

    ref = head_reference(x, wq, wk, wv)
    assert out.shape == (B, T, H), out.shape
    max_err = float(jnp.max(jnp.abs(out - ref)))
    # Slightly loose tolerance to accommodate the approx (EUP) reciprocal.
    assert max_err < 5e-3, max_err

    print("KERNEL_OK")
</pallas_src>

<mosaic_0001>
module attributes {stable_mosaic.version = 11 : i64} {
  func.func @_head_flash_kernel(%arg0: i32, %arg1: i32, %arg2: i32, %arg3: memref<1x64x128xf32, #tpu.memory_space<vmem>>, %arg4: memref<1x64x128xf32, #tpu.memory_space<vmem>>, %arg5: memref<128x16xf32, #tpu.memory_space<vmem>>, %arg6: memref<128x32xf32, #tpu.memory_space<vmem>>, %arg7: memref<1x64x16xf32, #tpu.memory_space<vmem>>, %arg8: memref<64x16xf32, #tpu.memory_space<vmem>>, %arg9: memref<64x1xf32, #tpu.memory_space<vmem>>, %arg10: memref<64x1xf32, #tpu.memory_space<vmem>>, %arg11: memref<64x16xf32, #tpu.memory_space<vmem>>) attributes {dimension_semantics = [#tpu.dimension_semantics<parallel>, #tpu.dimension_semantics<parallel>, #tpu.dimension_semantics<arbitrary>], iteration_bounds = array<i64: 2, 2, 2>, scalar_prefetch = 0 : i64, scratch_operands = 4 : i64, tpu.core_type = #tpu.core_type<tc>, window_params = [{transform_indices = @transform_0, window_bounds = array<i64: 1, 64, 128>}, {transform_indices = @transform_1, window_bounds = array<i64: 1, 64, 128>}, {pipeline_mode = #tpu.pipeline_mode<synchronous>, transform_indices = @transform_2, window_bounds = array<i64: 128, 16>}, {pipeline_mode = #tpu.pipeline_mode<synchronous>, transform_indices = @transform_3, window_bounds = array<i64: 128, 32>}, {transform_indices = @transform_4, window_bounds = array<i64: 1, 64, 16>}]} {
    %c64_i32 = arith.constant 64 : i32
    %0 = arith.muli %arg1, %c64_i32 : i32
    %c64_i32_0 = arith.constant 64 : i32
    %1 = arith.muli %arg2, %c64_i32_0 : i32
    %c0_i32 = arith.constant 0 : i32
    %2 = arith.cmpi eq, %arg2, %c0_i32 : i32
    %3 = arith.extui %2 : i1 to i32
    %c0_i32_1 = arith.constant 0 : i32
    %4 = arith.cmpi ne, %3, %c0_i32_1 : i32
    scf.if %4 {
      %c0 = arith.constant 0 : index
      %c0_5 = arith.constant 0 : index
      %c0_6 = arith.constant 0 : index
      %12 = vector.load %arg3[%c0, %c0_5, %c0_6] : memref<1x64x128xf32, #tpu.memory_space<vmem>>, vector<1x64x128xf32>
      %13 = vector.shape_cast %12 : vector<1x64x128xf32> to vector<64x128xf32>
      %c0_7 = arith.constant 0 : index
      %c0_8 = arith.constant 0 : index
      %14 = vector.load %arg5[%c0_7, %c0_8] : memref<128x16xf32, #tpu.memory_space<vmem>>, vector<128x16xf32>
      %cst = arith.constant dense<0.000000e+00> : vector<64x16xf32>
      %15 = tpu.matmul %13, %14, %cst {dimension_numbers = #tpu.dot_dimension_numbers<[1], [0], [0], [1], [0, 0, 1, 1], [], []>} : vector<64x128xf32>, vector<128x16xf32>, vector<64x16xf32> -> vector<64x16xf32>
      %cst_9 = arith.constant 0.0883883461 : f32
      %16 = vector.broadcast %cst_9 : f32 to vector<64x16xf32>
      %17 = arith.mulf %15, %16 : vector<64x16xf32>
      %c0_10 = arith.constant 0 : index
      %c0_11 = arith.constant 0 : index
      %18 = vector.load %arg8[%c0_10, %c0_11] : memref<64x16xf32, #tpu.memory_space<vmem>>, vector<64x16xf32>
      tpu.vector_store %arg8[%c0_10, %c0_11], %17 {strides = array<i32>} : memref<64x16xf32, #tpu.memory_space<vmem>>, vector<64x16xf32>,
      %cst_12 = arith.constant 0xFF800000 : f32
      %19 = vector.broadcast %cst_12 : f32 to vector<64x1xf32>
      %c0_13 = arith.constant 0 : index
      %c0_14 = arith.constant 0 : index
      %20 = vector.load %arg9[%c0_13, %c0_14] : memref<64x1xf32, #tpu.memory_space<vmem>>, vector<64x1xf32>
      tpu.vector_store %arg9[%c0_13, %c0_14], %19 {strides = array<i32>} : memref<64x1xf32, #tpu.memory_space<vmem>>, vector<64x1xf32>,
      %cst_15 = arith.constant 0.000000e+00 : f32
      %21 = vector.broadcast %cst_15 : f32 to vector<64x1xf32>
      %c0_16 = arith.constant 0 : index
      %c0_17 = arith.constant 0 : index
      %22 = vector.load %arg10[%c0_16, %c0_17] : memref<64x1xf32, #tpu.memory_space<vmem>>, vector<64x1xf32>
      tpu.vector_store %arg10[%c0_16, %c0_17], %21 {strides = array<i32>} : memref<64x1xf32, #tpu.memory_space<vmem>>, vector<64x1xf32>,
      %cst_18 = arith.constant 0.000000e+00 : f32
      %23 = vector.broadcast %cst_18 : f32 to vector<64x16xf32>
      %c0_19 = arith.constant 0 : index
      %c0_20 = arith.constant 0 : index
      %24 = vector.load %arg11[%c0_19, %c0_20] : memref<64x16xf32, #tpu.memory_space<vmem>>, vector<64x16xf32>
      tpu.vector_store %arg11[%c0_19, %c0_20], %23 {strides = array<i32>} : memref<64x16xf32, #tpu.memory_space<vmem>>, vector<64x16xf32>,
    } else {
    }
    %c64_i32_2 = arith.constant 64 : i32
    %5 = arith.addi %0, %c64_i32_2 : i32
    %6 = arith.cmpi slt, %1, %5 : i32
    %7 = arith.extui %6 : i1 to i32
    %c0_i32_3 = arith.constant 0 : i32
    %8 = arith.cmpi ne, %7, %c0_i32_3 : i32
    scf.if %8 {
      %c0 = arith.constant 0 : index
      %c0_5 = arith.constant 0 : index
      %c0_6 = arith.constant 0 : index
      %12 = vector.load %arg4[%c0, %c0_5, %c0_6] : memref<1x64x128xf32, #tpu.memory_space<vmem>>, vector<1x64x128xf32>
      %13 = vector.shape_cast %12 : vector<1x64x128xf32> to vector<64x128xf32>
      %c0_7 = arith.constant 0 : index
      %c0_8 = arith.constant 0 : index
      %14 = vector.load %arg6[%c0_7, %c0_8] : memref<128x32xf32, #tpu.memory_space<vmem>>, vector<128x32xf32>
      %cst = arith.constant dense<0.000000e+00> : vector<64x32xf32>
      %15 = tpu.matmul %13, %14, %cst {dimension_numbers = #tpu.dot_dimension_numbers<[1], [0], [0], [1], [0, 0, 1, 1], [], []>} : vector<64x128xf32>, vector<128x32xf32>, vector<64x32xf32> -> vector<64x32xf32>
      %16 = vector.extract_strided_slice %15 {offsets = [0, 0], sizes = [64, 16], strides = [1, 1]} : vector<64x32xf32> to vector<64x16xf32>
      %17 = vector.extract_strided_slice %15 {offsets = [0, 16], sizes = [64, 16], strides = [1, 1]} : vector<64x32xf32> to vector<64x16xf32>
      %c0_9 = arith.constant 0 : index
      %c0_10 = arith.constant 0 : index
      %18 = vector.load %arg8[%c0_9, %c0_10] : memref<64x16xf32, #tpu.memory_space<vmem>>, vector<64x16xf32>
      %cst_11 = arith.constant dense<0.000000e+00> : vector<64x64xf32>
      %19 = tpu.matmul %18, %16, %cst_11 {dimension_numbers = #tpu.dot_dimension_numbers<[1], [1], [0], [0], [0, 0, 1, 0], [], []>} : vector<64x16xf32>, vector<64x16xf32>, vector<64x64xf32> -> vector<64x64xf32>
      %20 = tpu.iota {dimensions = array<i32: 0>} : vector<64x64xi32>
      %21 = vector.broadcast %0 : i32 to vector<64x64xi32>
      %22 = arith.addi %21, %20 : vector<64x64xi32>
      %23 = tpu.iota {dimensions = array<i32: 1>} : vector<64x64xi32>
      %24 = vector.broadcast %1 : i32 to vector<64x64xi32>
      %25 = arith.addi %24, %23 : vector<64x64xi32>
      %26 = arith.cmpi sle, %25, %22 : vector<64x64xi32>
      %cst_12 = arith.constant 0xFF800000 : f32
      %27 = vector.broadcast %cst_12 : f32 to vector<64x64xf32>
      %28 = arith.select %26, %19, %27 : vector<64x64xi1>, vector<64x64xf32>
      %c0_13 = arith.constant 0 : index
      %c0_14 = arith.constant 0 : index
      %29 = vector.load %arg9[%c0_13, %c0_14] : memref<64x1xf32, #tpu.memory_space<vmem>>, vector<64x1xf32>
      %cst_15 = arith.constant dense<0xFF800000> : vector<64xf32>
      %30 = vector.multi_reduction <maximumf>, %28, %cst_15 [1] : vector<64x64xf32> to vector<64xf32>
      %31 = vector.shape_cast %30 : vector<64xf32> to vector<64x1xf32>
      %32 = arith.maximumf %29, %31 : vector<64x1xf32>
      %33 = arith.subf %29, %32 : vector<64x1xf32>
      %34 = math.exp %33 : vector<64x1xf32>
      %35 = vector.broadcast %32 : vector<64x1xf32> to vector<64x64xf32>
      %36 = arith.subf %28, %35 : vector<64x64xf32>
      %37 = math.exp %36 : vector<64x64xf32>
      %c0_16 = arith.constant 0 : index
      %c0_17 = arith.constant 0 : index
      %38 = vector.load %arg10[%c0_16, %c0_17] : memref<64x1xf32, #tpu.memory_space<vmem>>, vector<64x1xf32>
      %39 = arith.mulf %34, %38 : vector<64x1xf32>
      %cst_18 = arith.constant dense<0.000000e+00> : vector<64xf32>
      %40 = vector.multi_reduction <add>, %37, %cst_18 [1] : vector<64x64xf32> to vector<64xf32>
      %41 = vector.shape_cast %40 : vector<64xf32> to vector<64x1xf32>
      %42 = arith.addf %39, %41 : vector<64x1xf32>
      %c0_19 = arith.constant 0 : index
      %c0_20 = arith.constant 0 : index
      %43 = vector.load %arg10[%c0_19, %c0_20] : memref<64x1xf32, #tpu.memory_space<vmem>>, vector<64x1xf32>
      tpu.vector_store %arg10[%c0_19, %c0_20], %42 {strides = array<i32>} : memref<64x1xf32, #tpu.memory_space<vmem>>, vector<64x1xf32>,
      %c0_21 = arith.constant 0 : index
      %c0_22 = arith.constant 0 : index
      %44 = vector.load %arg11[%c0_21, %c0_22] : memref<64x16xf32, #tpu.memory_space<vmem>>, vector<64x16xf32>
      %45 = vector.broadcast %34 : vector<64x1xf32> to vector<64x16xf32>
      %46 = arith.mulf %45, %44 : vector<64x16xf32>
      %cst_23 = arith.constant dense<0.000000e+00> : vector<64x16xf32>
      %47 = tpu.matmul %37, %17, %cst_23 {dimension_numbers = #tpu.dot_dimension_numbers<[1], [0], [0], [1], [0, 0, 1, 1], [], []>} : vector<64x64xf32>, vector<64x16xf32>, vector<64x16xf32> -> vector<64x16xf32>
      %48 = arith.addf %46, %47 : vector<64x16xf32>
      %c0_24 = arith.constant 0 : index
      %c0_25 = arith.constant 0 : index
      %49 = vector.load %arg11[%c0_24, %c0_25] : memref<64x16xf32, #tpu.memory_space<vmem>>, vector<64x16xf32>
      tpu.vector_store %arg11[%c0_24, %c0_25], %48 {strides = array<i32>} : memref<64x16xf32, #tpu.memory_space<vmem>>, vector<64x16xf32>,
      %c0_26 = arith.constant 0 : index
      %c0_27 = arith.constant 0 : index
      %50 = vector.load %arg9[%c0_26, %c0_27] : memref<64x1xf32, #tpu.memory_space<vmem>>, vector<64x1xf32>
      tpu.vector_store %arg9[%c0_26, %c0_27], %32 {strides = array<i32>} : memref<64x1xf32, #tpu.memory_space<vmem>>, vector<64x1xf32>,
    } else {
    }
    %c1_i32 = arith.constant 1 : i32
    %9 = arith.cmpi eq, %arg2, %c1_i32 : i32
    %10 = arith.extui %9 : i1 to i32
    %c0_i32_4 = arith.constant 0 : i32
    %11 = arith.cmpi ne, %10, %c0_i32_4 : i32
    scf.if %11 {
      %c0 = arith.constant 0 : index
      %c0_5 = arith.constant 0 : index
      %12 = vector.load %arg10[%c0, %c0_5] : memref<64x1xf32, #tpu.memory_space<vmem>>, vector<64x1xf32>
      %13 = tpu.reciprocal %12 {approx = true} : vector<64x1xf32> -> vector<64x1xf32>
      %c0_6 = arith.constant 0 : index
      %c0_7 = arith.constant 0 : index
      %14 = vector.load %arg11[%c0_6, %c0_7] : memref<64x16xf32, #tpu.memory_space<vmem>>, vector<64x16xf32>
      %15 = vector.broadcast %13 : vector<64x1xf32> to vector<64x16xf32>
      %16 = arith.mulf %14, %15 : vector<64x16xf32>
      %c0_8 = arith.constant 0 : index
      %c0_9 = arith.constant 0 : index
      %c0_10 = arith.constant 0 : index
      %17 = vector.load %arg7[%c0_8, %c0_9, %c0_10] : memref<1x64x16xf32, #tpu.memory_space<vmem>>, vector<1x64x16xf32>
      %18 = vector.shape_cast %17 : vector<1x64x16xf32> to vector<64x16xf32>
      %19 = vector.shape_cast %16 : vector<64x16xf32> to vector<1x64x16xf32>
      tpu.vector_store %arg7[%c0_8, %c0_9, %c0_10], %19 {strides = array<i32>} : memref<1x64x16xf32, #tpu.memory_space<vmem>>, vector<1x64x16xf32>,
    } else {
    }
    return
  }
  func.func @transform_0(%arg0: i32, %arg1: i32, %arg2: i32) -> (i32, i32, i32) {
    %c0_i32 = arith.constant 0 : i32
    %c0_i32_0 = arith.constant 0 : i32
    return %arg0, %arg1, %c0_i32 : i32, i32, i32
  }
  func.func @transform_1(%arg0: i32, %arg1: i32, %arg2: i32) -> (i32, i32, i32) {
    %c0_i32 = arith.constant 0 : i32
    %c0_i32_0 = arith.constant 0 : i32
    return %arg0, %arg2, %c0_i32 : i32, i32, i32
  }
  func.func @transform_2(%arg0: i32, %arg1: i32, %arg2: i32) -> (i32, i32) {
    %c0_i32 = arith.constant 0 : i32
    %c0_i32_0 = arith.constant 0 : i32
    %c0_i32_1 = arith.constant 0 : i32
    return %c0_i32, %c0_i32_0 : i32, i32
  }
  func.func @transform_3(%arg0: i32, %arg1: i32, %arg2: i32) -> (i32, i32) {
    %c0_i32 = arith.constant 0 : i32
    %c0_i32_0 = arith.constant 0 : i32
    %c0_i32_1 = arith.constant 0 : i32
    return %c0_i32, %c0_i32_0 : i32, i32
  }
  func.func @transform_4(%arg0: i32, %arg1: i32, %arg2: i32) -> (i32, i32, i32) {
    %c0_i32 = arith.constant 0 : i32
    %c0_i32_0 = arith.constant 0 : i32
    return %arg0, %arg1, %c0_i32 : i32, i32, i32
  }
}

</mosaic_0001>

<llo_original>
// kernel: tpu_custom_call.1
$region0: #{tpu_custom_call.1}
  #allocation0 [shape = 'u32[]', space=smem, size = 0x4, offset = 0x4, fixed_abs, tag = 'smem constant byte address 0x4 - core index']
  #allocation1 [shape = 'u32[144,128]{1,0:T(1,128)}', space=vmem, size = 0x12000, scoped, tag = 'internal scratch']
  #allocation2 [shape = 'f32[64,16]{1,0:T(8,128)}', space=vmem, size = 0x8000, scoped, tag = 'scratch operand']
  #allocation3 [shape = 'f32[64,1]{1,0:T(8,128)}', space=vmem, size = 0x8000, scoped, tag = 'scratch operand']
  #allocation4 [shape = 'f32[64,1]{1,0:T(8,128)}', space=vmem, size = 0x8000, scoped, tag = 'scratch operand']
  #allocation5 [shape = 'f32[64,16]{1,0:T(8,128)}', space=vmem, size = 0x8000, scoped, tag = 'scratch operand']
  %s0 = inlined_call_operand.vmem [shape: f32[2,128,128], index: 0, kind: input, shape index: {}]
  %s1 = inlined_call_operand.hbm [shape: f32[2,128,128], index: 1, kind: input, shape index: {}]
  %s2 = inlined_call_operand.vmem [shape: f32[128,16], index: 2, kind: input, shape index: {}]
  %s3 = inlined_call_operand.vmem [shape: f32[128,32], index: 3, kind: input, shape index: {}]
  %s4 = inlined_call_operand.vmem [shape: f32[2,128,16], index: 4, kind: output, shape index: {}]
  %s5 = sld [smem:[#allocation0]]
  $region65: #{tpu_custom_call.1} parent=0
    _
  %s7 = ssub.s32 1, %s5
  %s8 = scalar_select 0, %s7, %s5
  $region1: #{tpu_custom_call.1} parent=0
    #allocation6 [shape = 'u8[65536]{0}', space=vmem, size = 0x10000, scoped, tag = 'input window, operand 1']
    #allocation7 [shape = 's32[2]{0}', space=sflag, size = 0x8, scoped, tag = 'scoped memory for tpu_custom_call.1']
    %9 = vsyncpa [#allocation7], 0
    %s10 = scalar_lea.sflag [#allocation7], 1
    %11 = vsyncpa %s10, 0
    loop: start=0, step=1, limit=10
    $region2: #{tpu_custom_call.1} parent=1 // loop_pre_header
      _
    $region3: #{tpu_custom_call.1} parent=1 // loop_header
      %s13 = sphi 0, %s17
      %p14 = scmp.ge.s32.totalorder %s13, 10
      %s20 = sphi 0, %s39
      %s21 = sphi 0, %s35
      %s22 = sphi 0, %s31
      %s23 = sphi 0, %s20
      %s24 = sphi 0, %s21
      %s25 = sphi 0, %s22
      %s26 = sphi 0, %s23
      %s27 = sphi 0, %s24
      %s28 = sphi 0, %s25
      %s44 = sphi 0, %s46
      %s47 = sphi 0, %s44
      %s48 = sphi 0, %s47
      %s64 = sphi 0, %s48
      %s72 = sphi 0, %s74
      %s75 = sphi 0, %s72
      %s76 = sphi 0, %s75
      %s92 = sphi 0, %s76
      %s96 = sphi 0, %s96
      %s98 = sphi 0, %s96
      %s99 = sphi 0, %s98
      %s113 = sphi 0, %s99
      %s117 = sphi 0, %s117
      %s119 = sphi 0, %s117
      %s120 = sphi 0, %s119
      %s134 = sphi 0, %s120
      %s142 = sphi 0, %s144
      %s145 = sphi 0, %s142
      %s146 = sphi 0, %s145
      %s162 = sphi 0, %s146
    $region4: #{tpu_custom_call.1} parent=1 // loop_header_branch
      %16 = sbr.rel (%p14) target = $region8
    $region5: #{tpu_custom_call.1} parent=1 // loop_body
      %s18 = ssub.s32 %s13, 1
      %s19 = ssub.s32 %s13, 2
      %s29 = sadd.s32 1, %s22
      %p30 = scmp.ge.s32.totalorder %s29, 2
      %s31 = scalar_select %p30, 0, %s29
      %s32 = sadd.s32 1, %s21
      %s33 = scalar_select %p30, %s32, %s21
      %p34 = scmp.ge.s32.totalorder %s33, 2
      %s35 = scalar_select %p34, 0, %s33
      %s36 = sadd.s32 1, %s20
      %s37 = scalar_select %p34, %s36, %s20
      %p38 = scmp.ge.s32.totalorder %s37, 2
      %s39 = scalar_select %p38, 0, %s37
      %s40 = ssub.s32 %s20, %s39
      %s41 = ssub.s32 %s21, %s35
      %s42 = sor.u32 %s40, %s41
      %p43 = scmp.eq.s32.totalorder %s42, 0
      %s45 = sadd.s32 %s44, 1
      %s46 = scalar_select %p43, %s44, %s45
      %p49 = pneg %p43
      %p50 = scmp.eq.s32.totalorder %s13, 7
      %p51 = por %p49, %p50
      %p52 = scmp.ne.s32.totalorder %s44, %s47
      %p53 = scmp.eq.s32.totalorder %s13, 0
      %p54 = por %p52, %p53
      %p55 = scmp.ne.s32.totalorder %s44, %s47
      %p56 = scmp.eq.s32.totalorder %s18, 7
      %p57 = por %p55, %p56
      %p58 = scmp.ne.s32.totalorder %s47, %s48
      %p59 = scmp.eq.s32.totalorder %s18, 0
      %p60 = por %p58, %p59
      %p61 = scmp.ne.s32.totalorder %s47, %s48
      %p62 = scmp.eq.s32.totalorder %s19, 7
      %p63 = por %p61, %p62
      %p65 = scmp.ne.s32.totalorder %s48, %s64
      %p66 = scmp.eq.s32.totalorder %s19, 0
      %p67 = por %p65, %p66
      %s68 = ssub.s32 %s20, %s39
      %s69 = ssub.s32 %s22, %s31
      %s70 = sor.u32 %s68, %s69
      %p71 = scmp.eq.s32.totalorder %s70, 0
      %s73 = sadd.s32 %s72, 1
      %s74 = scalar_select %p71, %s72, %s73
      %p77 = pneg %p71
      %p78 = scmp.eq.s32.totalorder %s13, 7
      %p79 = por %p77, %p78
      %p80 = scmp.ne.s32.totalorder %s72, %s75
      %p81 = scmp.eq.s32.totalorder %s13, 0
      %p82 = por %p80, %p81
      %p83 = scmp.ne.s32.totalorder %s72, %s75
      %p84 = scmp.eq.s32.totalorder %s18, 7
      %p85 = por %p83, %p84
      %p86 = scmp.ne.s32.totalorder %s75, %s76
      %p87 = scmp.eq.s32.totalorder %s18, 0
      %p88 = por %p86, %p87
      %p89 = scmp.ne.s32.totalorder %s75, %s76
      %p90 = scmp.eq.s32.totalorder %s19, 7
      %p91 = por %p89, %p90
      %p93 = scmp.ne.s32.totalorder %s76, %s92
      %p94 = scmp.eq.s32.totalorder %s19, 0
      %p95 = por %p93, %p94
      %s97 = sadd.s32 %s96, 1
      %p100 = scmp.eq.s32.totalorder %s13, 7
      %p101 = scmp.ne.s32.totalorder %s96, %s98
      %p102 = scmp.eq.s32.totalorder %s13, 0
      %p103 = por %p101, %p102
      %p104 = scmp.ne.s32.totalorder %s96, %s98
      %p105 = scmp.eq.s32.totalorder %s18, 7
      %p106 = por %p104, %p105
      %p107 = scmp.ne.s32.totalorder %s98, %s99
      %p108 = scmp.eq.s32.totalorder %s18, 0
      %p109 = por %p107, %p108
      %p110 = scmp.ne.s32.totalorder %s98, %s99
      %p111 = scmp.eq.s32.totalorder %s19, 7
      %p112 = por %p110, %p111
      %p114 = scmp.ne.s32.totalorder %s99, %s113
      %p115 = scmp.eq.s32.totalorder %s19, 0
      %p116 = por %p114, %p115
      %s118 = sadd.s32 %s117, 1
      %p121 = scmp.eq.s32.totalorder %s13, 7
      %p122 = scmp.ne.s32.totalorder %s117, %s119
      %p123 = scmp.eq.s32.totalorder %s13, 0
      %p124 = por %p122, %p123
      %p125 = scmp.ne.s32.totalorder %s117, %s119
      %p126 = scmp.eq.s32.totalorder %s18, 7
      %p127 = por %p125, %p126
      %p128 = scmp.ne.s32.totalorder %s119, %s120
      %p129 = scmp.eq.s32.totalorder %s18, 0
      %p130 = por %p128, %p129
      %p131 = scmp.ne.s32.totalorder %s119, %s120
      %p132 = scmp.eq.s32.totalorder %s19, 7
      %p133 = por %p131, %p132
      %p135 = scmp.ne.s32.totalorder %s120, %s134
      %p136 = scmp.eq.s32.totalorder %s19, 0
      %p137 = por %p135, %p136
      %s138 = ssub.s32 %s20, %s39
      %s139 = ssub.s32 %s21, %s35
      %s140 = sor.u32 %s138, %s139
      %p141 = scmp.eq.s32.totalorder %s140, 0
      %s143 = sadd.s32 %s142, 1
      %s144 = scalar_select %p141, %s142, %s143
      %p147 = pneg %p141
      %p148 = scmp.eq.s32.totalorder %s13, 7
      %p149 = por %p147, %p148
      %p150 = scmp.ne.s32.totalorder %s142, %s145
      %p151 = scmp.eq.s32.totalorder %s13, 0
      %p152 = por %p150, %p151
      %p153 = scmp.ne.s32.totalorder %s142, %s145
      %p154 = scmp.eq.s32.totalorder %s18, 7
      %p155 = por %p153, %p154
      %p156 = scmp.ne.s32.totalorder %s145, %s146
      %p157 = scmp.eq.s32.totalorder %s18, 0
      %p158 = por %p156, %p157
      %p159 = scmp.ne.s32.totalorder %s145, %s146
      %p160 = scmp.eq.s32.totalorder %s19, 7
      %p161 = por %p159, %p160
      %p163 = scmp.ne.s32.totalorder %s146, %s162
      %p164 = scmp.eq.s32.totalorder %s19, 0
      %p165 = por %p163, %p164
      %p166 = scmp.le.s32.totalorder 1, %s13
      %p167 = scmp.lt.s32.totalorder %s13, 9
      %p168 = pnand %p166, %p167
      %p169 = pneg %p168
      // Predicated region
      $region9: #{tpu_custom_call.1} parent=5 // pred_check
        _
      $region10: #{tpu_custom_call.1} parent=5 // pred_check_branch
        %171 = sbr.rel (%p168) target = $region12
      $region11: #{tpu_custom_call.1} parent=5 // pred_region
        %s172 = ssub.s32 %s13, 1
        // Predicated region
        $region13: #{tpu_custom_call.1} parent=11 // pred_check
          %p173 = pneg %p109
        $region14: #{tpu_custom_call.1} parent=11 // pred_check_branch
          %175 = sbr.rel (%p173) target = $region16
        $region15: #{tpu_custom_call.1} parent=11 // pred_region
          _
        $region16: #{tpu_custom_call.1} parent=11 // pred_fallthru
          _
        // Predicated region
        $region17: #{tpu_custom_call.1} parent=11 // pred_check
          %p176 = pneg %p130
        $region18: #{tpu_custom_call.1} parent=11 // pred_check_branch
          %178 = sbr.rel (%p176) target = $region20
        $region19: #{tpu_custom_call.1} parent=11 // pred_region
          _
        $region20: #{tpu_custom_call.1} parent=11 // pred_fallthru
          _
      $region12: #{tpu_custom_call.1} parent=5 // pred_fallthru
        _
      %p179 = scmp.lt.s32.totalorder %s13, 8
      // Predicated region
      $region21: #{tpu_custom_call.1} parent=5 // pred_check
        %p180 = pneg %p179
      $region22: #{tpu_custom_call.1} parent=5 // pred_check_branch
        %182 = sbr.rel (%p180) target = $region24
      $region23: #{tpu_custom_call.1} parent=5 // pred_region
        // Predicated region
        $region25: #{tpu_custom_call.1} parent=23 // pred_check
          %p183 = pneg %p54
        $region26: #{tpu_custom_call.1} parent=23 // pred_check_branch
          %185 = sbr.rel (%p183) target = $region28
        $region27: #{tpu_custom_call.1} parent=23 // pred_region
          %s186 = smul.u32 8, %s21
          %p187 = scmp.lt.s32.totalorder %s20, 1
          %s188 = scalar_select %p187, %s20, 1
          %p189 = scmp.lt.s32.totalorder %s186, 15
          %s190 = scalar_select %p189, %s186, 15
          %s191 = smul.addr %s188, 16
          %s192 = sadd.s32 %s190, %s191
          %s193 = smul.addr %s192, 8
          %s194 = scalar_lea.vmem %s0, %s193
          %s195 = smul.u32 8, %s21
        $region28: #{tpu_custom_call.1} parent=23 // pred_fallthru
          _
        // Predicated region
        $region29: #{tpu_custom_call.1} parent=23 // pred_check
          %p196 = pneg %p82
        $region30: #{tpu_custom_call.1} parent=23 // pred_check_branch
          %198 = sbr.rel (%p196) target = $region32
        $region31: #{tpu_custom_call.1} parent=23 // pred_region
          %s199 = sand.u32 %s72, 1
          %s200 = scalar_lea.sflag [#allocation7], %s199
          %s201 = sand.u32 %s72, 1
          %s202 = smul.addr %s201, 64
          %s203 = scalar_lea.vmem [#allocation6], %s202
          %s204 = smul.u32 8, %s22
          %s206 = ssub.s32 1024, 1024
          %207 = vsyncadd %s200, %s206
          %s208 = smul.addr %s20, 16
          %s209 = sadd.s32 %s204, %s208
          %s210 = smul.addr %s209, 128
          %s211 = scalar_lea.hbm %s1, %s210
          %s212 = sshll.u32 %s203, 4
          %s213 = int_to_ptr.vmem [resolvable:$true] %s212
          %218 = dma.hbm_to_vmem [thread:$0]  %s211, 1024, %s213, %s200, 128, 128, 8
        $region32: #{tpu_custom_call.1} parent=23 // pred_fallthru
          _
      $region24: #{tpu_custom_call.1} parent=5 // pred_fallthru
        _
      %p219 = scmp.le.s32.totalorder 1, %s13
      %p220 = scmp.lt.s32.totalorder %s13, 9
      %p221 = pnand %p219, %p220
      %p222 = pneg %p221
      // Predicated region
      $region33: #{tpu_custom_call.1} parent=5 // pred_check
        _
      $region34: #{tpu_custom_call.1} parent=5 // pred_check_branch
        %224 = sbr.rel (%p221) target = $region36
      $region35: #{tpu_custom_call.1} parent=5 // pred_region
        %s225 = ssub.s32 %s13, 1
        %s226 = sand.u32 %s75, 1
        %s227 = scalar_lea.sflag [#allocation7], %s226
        %s228 = sand.u32 %s75, 1
        %s229 = smul.addr %s228, 64
        %s230 = scalar_lea.vmem [#allocation6], %s229
        // Predicated region
        $region37: #{tpu_custom_call.1} parent=35 // pred_check
          %p231 = pneg %p88
        $region38: #{tpu_custom_call.1} parent=35 // pred_check_branch
          %233 = sbr.rel (%p231) target = $region40
        $region39: #{tpu_custom_call.1} parent=35 // pred_region
          %234 = dma.done %s227, 1024
        $region40: #{tpu_custom_call.1} parent=35 // pred_fallthru
          _
        %s235 = smul.u32 8, %s24
        %p236 = scmp.lt.s32.totalorder %s23, 1
        %s237 = scalar_select %p236, %s23, 1
        %p238 = scmp.lt.s32.totalorder %s235, 15
        %s239 = scalar_select %p238, %s235, 15
        %s240 = smul.addr %s237, 16
        %s241 = sadd.s32 %s239, %s240
        %s242 = smul.addr %s241, 8
        %s243 = scalar_lea.vmem %s0, %s242
        %p244 = pneg %p60
        %p245 = pneg %p57
        %s246 = sand.u32 %s75, 1
        %s247 = scalar_lea.sflag [#allocation7], %s246
        %s248 = sand.u32 %s75, 1
        %s249 = smul.addr %s248, 64
        %s250 = scalar_lea.vmem [#allocation6], %s249
        %p251 = pneg %p88
        %p252 = pneg %p85
        %p253 = pneg %p109
        %p254 = pneg %p106
        %p255 = pneg %p130
        %p256 = pneg %p127
        %p257 = pneg %p158
        %p258 = pneg %p155
        %s259 = smul.u32 8, %s24
        %p260 = scmp.lt.s32.totalorder %s23, 1
        %s261 = scalar_select %p260, %s23, 1
        %p262 = scmp.lt.s32.totalorder %s259, 15
        %s263 = scalar_select %p262, %s259, 15
        %s264 = smul.addr %s261, 16
        %s265 = sadd.s32 %s263, %s264
        %s266 = smul.addr %s265, 8
        %s267 = scalar_lea.vmem %s4, %s266
        %s268 = smul.u32 8, %s24
        %p269 = scmp.lt.s32.totalorder %s23, 1
        %s270 = scalar_select %p269, %s23, 1
        %p271 = scmp.lt.s32.totalorder %s268, 15
        %s272 = scalar_select %p271, %s268, 15
        %s273 = smul.addr %s270, 16
        %s274 = sadd.s32 %s272, %s273
        %s275 = smul.addr %s274, 8
        %s276 = scalar_lea.vmem %s0, %s275
        %s277 = smul.u32 8, %s24
        %s278 = smul.u32 8, %s25
        %s279 = smul.u32 8, %s24
        %p280 = scmp.lt.s32.totalorder %s23, 1
        %s281 = scalar_select %p280, %s23, 1
        %p282 = scmp.lt.s32.totalorder %s279, 15
        %s283 = scalar_select %p282, %s279, 15
        %s284 = smul.addr %s281, 16
        %s285 = sadd.s32 %s283, %s284
        %s286 = smul.addr %s285, 8
        %s287 = scalar_lea.vmem %s4, %s286
        %s288 = smul.u32 8, %s24
        %s289 = smul.u32 %s24, 64
        %s290 = smul.u32 %s25, 64
        %p291 = scmp.eq.s32.totalorder %s25, 0
        // Predicated region
        $region41: #{tpu_custom_call.1} parent=35 // pred_check
          %p292 = pneg %p291
        $region42: #{tpu_custom_call.1} parent=35 // pred_check_branch
          %294 = sbr.rel (%p292) target = $region44
        $region43: #{tpu_custom_call.1} parent=35 // pred_region
          %v295 = vld [vmem:[%s276] sm:$0xff]
          %v296 = vld [vmem:[%s276 + $0x8] sm:$0xff]
          %v297 = vld [vmem:[%s276 + $0x10] sm:$0xff]
          %v298 = vld [vmem:[%s276 + $0x18] sm:$0xff]
          %v299 = vld [vmem:[%s276 + $0x20] sm:$0xff]
          %v300 = vld [vmem:[%s276 + $0x28] sm:$0xff]
          %v301 = vld [vmem:[%s276 + $0x30] sm:$0xff]
          %v302 = vld [vmem:[%s276 + $0x38] sm:$0xff]
          %v303 = vld [vmem:[%s2] sm:$0xff]
          %v304 = vld [vmem:[%s2 + $0x8] sm:$0xff]
          %v305 = vld [vmem:[%s2 + $0x10] sm:$0xff]
          %v306 = vld [vmem:[%s2 + $0x18] sm:$0xff]
          %v307 = vld [vmem:[%s2 + $0x20] sm:$0xff]
          %v308 = vld [vmem:[%s2 + $0x28] sm:$0xff]
          %v309 = vld [vmem:[%s2 + $0x30] sm:$0xff]
          %v310 = vld [vmem:[%s2 + $0x38] sm:$0xff]
          %v311 = vld [vmem:[%s2 + $0x40] sm:$0xff]
          %v312 = vld [vmem:[%s2 + $0x48] sm:$0xff]
          %v313 = vld [vmem:[%s2 + $0x50] sm:$0xff]
          %v314 = vld [vmem:[%s2 + $0x58] sm:$0xff]
          %v315 = vld [vmem:[%s2 + $0x60] sm:$0xff]
          %v316 = vld [vmem:[%s2 + $0x68] sm:$0xff]
          %v317 = vld [vmem:[%s2 + $0x70] sm:$0xff]
          %v318 = vld [vmem:[%s2 + $0x78] sm:$0xff]
          %319 = vmatprep.subr.mxu0 0.0
          %320 = vmatpush1.msra.mxu0 %v318
          %321 = vmatprep.subr.mxu0 0.0
          %322 = vmatpush1.msra.mxu0 %v317
          %323 = vmatprep.subr.mxu0 0.0
          %324 = vmatpush1.msra.mxu0 %v316
          %325 = vmatprep.subr.mxu0 0.0
          %326 = vmatpush1.msra.mxu0 %v315
          %327 = vmatprep.subr.mxu0 0.0
          %328 = vmatpush1.msra.mxu0 %v314
          %329 = vmatprep.subr.mxu0 0.0
          %330 = vmatpush1.msra.mxu0 %v313
          %331 = vmatprep.subr.mxu0 0.0
          %332 = vmatpush1.msra.mxu0 %v312
          %333 = vmatprep.subr.mxu0 0.0
          %334 = vmatpush1.msra.mxu0 %v311
          %335 = vmatprep.subr.mxu0 0.0
          %336 = vmatpush1.msra.mxu0 %v310
          %337 = vmatprep.subr.mxu0 0.0
          %338 = vmatpush1.msra.mxu0 %v309
          %339 = vmatprep.subr.mxu0 0.0
          %340 = vmatpush1.msra.mxu0 %v308
          %341 = vmatprep.subr.mxu0 0.0
          %342 = vmatpush1.msra.mxu0 %v307
          %343 = vmatprep.subr.mxu0 0.0
          %344 = vmatpush1.msra.mxu0 %v306
          %345 = vmatprep.subr.mxu0 0.0
          %346 = vmatpush1.msra.mxu0 %v305
          %347 = vmatprep.subr.mxu0 0.0
          %348 = vmatpush1.msra.mxu0 %v304
          %349 = vmatprep.subr.mxu0 0.0
          %350 = vmatpush1.msra.mxu0 %v303
          %351 = vmatprep.subr.mxu0 0.0
          %352 = vmatpush2.msra.mxu0 0.0
          %353 = vmatprep.subr.mxu0 0.0
          %354 = vmatpush2.msra.mxu0 0.0
          %355 = vmatprep.subr.mxu0 0.0
          %356 = vmatpush2.msra.mxu0 0.0
          %357 = vmatprep.subr.mxu0 0.0
          %358 = vmatpush2.msra.mxu0 0.0
          %359 = vmatprep.subr.mxu0 0.0
          %360 = vmatpush2.msra.mxu0 0.0
          %361 = vmatprep.subr.mxu0 0.0
          %362 = vmatpush2.msra.mxu0 0.0
          %363 = vmatprep.subr.mxu0 0.0
          %364 = vmatpush2.msra.mxu0 0.0
          %365 = vmatprep.subr.mxu0 0.0
          %366 = vmatpush2.msra.mxu0 0.0
          %367 = vmatprep.subr.mxu0 0.0
          %368 = vmatpush2.msra.mxu0 0.0
          %369 = vmatprep.subr.mxu0 0.0
          %370 = vmatpush2.msra.mxu0 0.0
          %371 = vmatprep.subr.mxu0 0.0
          %372 = vmatpush2.msra.mxu0 0.0
          %373 = vmatprep.subr.mxu0 0.0
          %374 = vmatpush2.msra.mxu0 0.0
          %375 = vmatprep.subr.mxu0 0.0
          %376 = vmatpush2.msra.mxu0 0.0
          %377 = vmatprep.subr.mxu0 0.0
          %378 = vmatpush2.msra.mxu0 0.0
          %379 = vmatprep.subr.mxu0 0.0
          %380 = vmatpush2.msra.mxu0 0.0
          %381 = vmatprep.subr.mxu0 0.0
          %382 = vmatpush2.msra.mxu0 0.0
          %383 = vmatprep.mubr.f32.mxu0 0.0
          %384 = vmatmul.mubr.f32.gmra.mxu0 %v295
          %v385 = vpop.f32.mrf.mxu0
          %v386 = vadd.f32 0.0, %v385
          %v387 = vpop.f32.mrf.mxu0
          %388 = vmatprep.mubr.f32.mxu0 0.0
          %389 = vmatmul.mubr.f32.gmra.mxu0 %v296
          %v390 = vpop.f32.mrf.mxu0
          %v391 = vadd.f32 0.0, %v390
          %v392 = vpop.f32.mrf.mxu0
          %393 = vmatprep.mubr.f32.mxu0 0.0
          %394 = vmatmul.mubr.f32.gmra.mxu0 %v297
          %v395 = vpop.f32.mrf.mxu0
          %v396 = vadd.f32 0.0, %v395
          %v397 = vpop.f32.mrf.mxu0
          %398 = vmatprep.mubr.f32.mxu0 0.0
          %399 = vmatmul.mubr.f32.gmra.mxu0 %v298
          %v400 = vpop.f32.mrf.mxu0
          %v401 = vadd.f32 0.0, %v400
          %v402 = vpop.f32.mrf.mxu0
          %403 = vmatprep.mubr.f32.mxu0 0.0
          %404 = vmatmul.mubr.f32.gmra.mxu0 %v299
          %v405 = vpop.f32.mrf.mxu0
          %v406 = vadd.f32 0.0, %v405
          %v407 = vpop.f32.mrf.mxu0
          %408 = vmatprep.mubr.f32.mxu0 0.0
          %409 = vmatmul.mubr.f32.gmra.mxu0 %v300
          %v410 = vpop.f32.mrf.mxu0
          %v411 = vadd.f32 0.0, %v410
          %v412 = vpop.f32.mrf.mxu0
          %413 = vmatprep.mubr.f32.mxu0 0.0
          %414 = vmatmul.mubr.f32.gmra.mxu0 %v301
          %v415 = vpop.f32.mrf.mxu0
          %v416 = vadd.f32 0.0, %v415
          %v417 = vpop.f32.mrf.mxu0
          %418 = vmatprep.mubr.f32.mxu0 0.0
          %419 = vmatmul.mubr.f32.gmra.mxu0 %v302
          %v420 = vpop.f32.mrf.mxu0
          %v421 = vadd.f32 0.0, %v420
          %v422 = vpop.f32.mrf.mxu0
          %423 = vdwg.mxu0
          %v424 = vmul.f32 %v386, 0.088388346
          %v425 = vmul.f32 %v391, 0.088388346
          %v426 = vmul.f32 %v396, 0.088388346
          %v427 = vmul.f32 %v401, 0.088388346
          %v428 = vmul.f32 %v406, 0.088388346
          %v429 = vmul.f32 %v411, 0.088388346
          %v430 = vmul.f32 %v416, 0.088388346
          %v431 = vmul.f32 %v421, 0.088388346
          %vm432 = vcmask 130048
          %433 = vst.msk [vmem:[#allocation2] sm:$0xff] %vm432, %v424
          %434 = vst.msk [vmem:[#allocation2 + $0x8] sm:$0xff] %vm432, %v425
          %435 = vst.msk [vmem:[#allocation2 + $0x10] sm:$0xff] %vm432, %v426
          %436 = vst.msk [vmem:[#allocation2 + $0x18] sm:$0xff] %vm432, %v427
          %437 = vst.msk [vmem:[#allocation2 + $0x20] sm:$0xff] %vm432, %v428
          %438 = vst.msk [vmem:[#allocation2 + $0x28] sm:$0xff] %vm432, %v429
          %439 = vst.msk [vmem:[#allocation2 + $0x30] sm:$0xff] %vm432, %v430
          %440 = vst.msk [vmem:[#allocation2 + $0x38] sm:$0xff] %vm432, %v431
          %vm441 = vcmask 7168
          %442 = vst.msk [vmem:[#allocation3] sm:$0xff] %vm441, -inf
          %443 = vst.msk [vmem:[#allocation3 + $0x8] sm:$0xff] %vm441, -inf
          %444 = vst.msk [vmem:[#allocation3 + $0x10] sm:$0xff] %vm441, -inf
          %445 = vst.msk [vmem:[#allocation3 + $0x18] sm:$0xff] %vm441, -inf
          %446 = vst.msk [vmem:[#allocation3 + $0x20] sm:$0xff] %vm441, -inf
          %447 = vst.msk [vmem:[#allocation3 + $0x28] sm:$0xff] %vm441, -inf
          %448 = vst.msk [vmem:[#allocation3 + $0x30] sm:$0xff] %vm441, -inf
          %449 = vst.msk [vmem:[#allocation3 + $0x38] sm:$0xff] %vm441, -inf
          %450 = vst.msk [vmem:[#allocation4] sm:$0xff] %vm441, 0.0
          %451 = vst.msk [vmem:[#allocation4 + $0x8] sm:$0xff] %vm441, 0.0
          %452 = vst.msk [vmem:[#allocation4 + $0x10] sm:$0xff] %vm441, 0.0
          %453 = vst.msk [vmem:[#allocation4 + $0x18] sm:$0xff] %vm441, 0.0
          %454 = vst.msk [vmem:[#allocation4 + $0x20] sm:$0xff] %vm441, 0.0
          %455 = vst.msk [vmem:[#allocation4 + $0x28] sm:$0xff] %vm441, 0.0
          %456 = vst.msk [vmem:[#allocation4 + $0x30] sm:$0xff] %vm441, 0.0
          %457 = vst.msk [vmem:[#allocation4 + $0x38] sm:$0xff] %vm441, 0.0
          %458 = vst.msk [vmem:[#allocation5] sm:$0xff] %vm432, 0.0
          %459 = vst.msk [vmem:[#allocation5 + $0x8] sm:$0xff] %vm432, 0.0
          %460 = vst.msk [vmem:[#allocation5 + $0x10] sm:$0xff] %vm432, 0.0
          %461 = vst.msk [vmem:[#allocation5 + $0x18] sm:$0xff] %vm432, 0.0
          %462 = vst.msk [vmem:[#allocation5 + $0x20] sm:$0xff] %vm432, 0.0
          %463 = vst.msk [vmem:[#allocation5 + $0x28] sm:$0xff] %vm432, 0.0
          %464 = vst.msk [vmem:[#allocation5 + $0x30] sm:$0xff] %vm432, 0.0
          %465 = vst.msk [vmem:[#allocation5 + $0x38] sm:$0xff] %vm432, 0.0
        $region44: #{tpu_custom_call.1} parent=35 // pred_fallthru
          _
        %s466 = sadd.s32 %s289, 64
        %p467 = scmp.lt.s32.totalorder %s290, %s466
        // Predicated region
        $region45: #{tpu_custom_call.1} parent=35 // pred_check
          %p468 = pneg %p467
        $region46: #{tpu_custom_call.1} parent=35 // pred_check_branch
          %470 = sbr.rel (%p468) target = $region48
        $region47: #{tpu_custom_call.1} parent=35 // pred_region
          %v471 = vld [vmem:[%s230] sm:$0xff]
          %v472 = vld [vmem:[%s230 + $0x8] sm:$0xff]
          %v473 = vld [vmem:[%s230 + $0x10] sm:$0xff]
          %v474 = vld [vmem:[%s230 + $0x18] sm:$0xff]
          %v475 = vld [vmem:[%s230 + $0x20] sm:$0xff]
          %v476 = vld [vmem:[%s230 + $0x28] sm:$0xff]
          %v477 = vld [vmem:[%s230 + $0x30] sm:$0xff]
          %v478 = vld [vmem:[%s230 + $0x38] sm:$0xff]
          %v479 = vld [vmem:[%s3] sm:$0xff]
          %v480 = vld [vmem:[%s3 + $0x8] sm:$0xff]
          %v481 = vld [vmem:[%s3 + $0x10] sm:$0xff]
          %v482 = vld [vmem:[%s3 + $0x18] sm:$0xff]
          %v483 = vld [vmem:[%s3 + $0x20] sm:$0xff]
          %v484 = vld [vmem:[%s3 + $0x28] sm:$0xff]
          %v485 = vld [vmem:[%s3 + $0x30] sm:$0xff]
          %v486 = vld [vmem:[%s3 + $0x38] sm:$0xff]
          %v487 = vld [vmem:[%s3 + $0x40] sm:$0xff]
          %v488 = vld [vmem:[%s3 + $0x48] sm:$0xff]
          %v489 = vld [vmem:[%s3 + $0x50] sm:$0xff]
          %v490 = vld [vmem:[%s3 + $0x58] sm:$0xff]
          %v491 = vld [vmem:[%s3 + $0x60] sm:$0xff]
          %v492 = vld [vmem:[%s3 + $0x68] sm:$0xff]
          %v493 = vld [vmem:[%s3 + $0x70] sm:$0xff]
          %v494 = vld [vmem:[%s3 + $0x78] sm:$0xff]
          %495 = vmatprep.subr.mxu0 0.0
          %496 = vmatpush1.msra.mxu0 %v494
          %497 = vmatprep.subr.mxu0 0.0
          %498 = vmatpush1.msra.mxu0 %v493
          %499 = vmatprep.subr.mxu0 0.0
          %500 = vmatpush1.msra.mxu0 %v492
          %501 = vmatprep.subr.mxu0 0.0
          %502 = vmatpush1.msra.mxu0 %v491
          %503 = vmatprep.subr.mxu0 0.0
          %504 = vmatpush1.msra.mxu0 %v490
          %505 = vmatprep.subr.mxu0 0.0
          %506 = vmatpush1.msra.mxu0 %v489
          %507 = vmatprep.subr.mxu0 0.0
          %508 = vmatpush1.msra.mxu0 %v488
          %509 = vmatprep.subr.mxu0 0.0
          %510 = vmatpush1.msra.mxu0 %v487
          %511 = vmatprep.subr.mxu0 0.0
          %512 = vmatpush1.msra.mxu0 %v486
          %513 = vmatprep.subr.mxu0 0.0
          %514 = vmatpush1.msra.mxu0 %v485
          %515 = vmatprep.subr.mxu0 0.0
          %516 = vmatpush1.msra.mxu0 %v484
          %517 = vmatprep.subr.mxu0 0.0
          %518 = vmatpush1.msra.mxu0 %v483
          %519 = vmatprep.subr.mxu0 0.0
          %520 = vmatpush1.msra.mxu0 %v482
          %521 = vmatprep.subr.mxu0 0.0
          %522 = vmatpush1.msra.mxu0 %v481
          %523 = vmatprep.subr.mxu0 0.0
          %524 = vmatpush1.msra.mxu0 %v480
          %525 = vmatprep.subr.mxu0 0.0
          %526 = vmatpush1.msra.mxu0 %v479
          %527 = vmatprep.subr.mxu0 0.0
          %528 = vmatpush2.msra.mxu0 0.0
          %529 = vmatprep.subr.mxu0 0.0
          %530 = vmatpush2.msra.mxu0 0.0
          %531 = vmatprep.subr.mxu0 0.0
          %532 = vmatpush2.msra.mxu0 0.0
          %533 = vmatprep.subr.mxu0 0.0
          %534 = vmatpush2.msra.mxu0 0.0
          %535 = vmatprep.subr.mxu0 0.0
          %536 = vmatpush2.msra.mxu0 0.0
          %537 = vmatprep.subr.mxu0 0.0
          %538 = vmatpush2.msra.mxu0 0.0
          %539 = vmatprep.subr.mxu0 0.0
          %540 = vmatpush2.msra.mxu0 0.0
          %541 = vmatprep.subr.mxu0 0.0
          %542 = vmatpush2.msra.mxu0 0.0
          %543 = vmatprep.subr.mxu0 0.0
          %544 = vmatpush2.msra.mxu0 0.0
          %545 = vmatprep.subr.mxu0 0.0
          %546 = vmatpush2.msra.mxu0 0.0
          %547 = vmatprep.subr.mxu0 0.0
          %548 = vmatpush2.msra.mxu0 0.0
          %549 = vmatprep.subr.mxu0 0.0
          %550 = vmatpush2.msra.mxu0 0.0
          %551 = vmatprep.subr.mxu0 0.0
          %552 = vmatpush2.msra.mxu0 0.0
          %553 = vmatprep.subr.mxu0 0.0
          %554 = vmatpush2.msra.mxu0 0.0
          %555 = vmatprep.subr.mxu0 0.0
          %556 = vmatpush2.msra.mxu0 0.0
          %557 = vmatprep.subr.mxu0 0.0
          %558 = vmatpush2.msra.mxu0 0.0
          %559 = vmatprep.mubr.f32.mxu0 0.0
          %560 = vmatmul.mubr.f32.gmra.mxu0 %v471
          %v561 = vpop.f32.mrf.mxu0
          %v562 = vadd.f32 0.0, %v561
          %v563 = vpop.f32.mrf.mxu0
          %564 = vmatprep.mubr.f32.mxu0 0.0
          %565 = vmatmul.mubr.f32.gmra.mxu0 %v472
          %v566 = vpop.f32.mrf.mxu0
          %v567 = vadd.f32 0.0, %v566
          %v568 = vpop.f32.mrf.mxu0
          %569 = vmatprep.mubr.f32.mxu0 0.0
          %570 = vmatmul.mubr.f32.gmra.mxu0 %v473
          %v571 = vpop.f32.mrf.mxu0
          %v572 = vadd.f32 0.0, %v571
          %v573 = vpop.f32.mrf.mxu0
          %574 = vmatprep.mubr.f32.mxu0 0.0
          %575 = vmatmul.mubr.f32.gmra.mxu0 %v474
          %v576 = vpop.f32.mrf.mxu0
          %v577 = vadd.f32 0.0, %v576
          %v578 = vpop.f32.mrf.mxu0
          %579 = vmatprep.mubr.f32.mxu0 0.0
          %580 = vmatmul.mubr.f32.gmra.mxu0 %v475
          %v581 = vpop.f32.mrf.mxu0
          %v582 = vadd.f32 0.0, %v581
          %v583 = vpop.f32.mrf.mxu0
          %584 = vmatprep.mubr.f32.mxu0 0.0
          %585 = vmatmul.mubr.f32.gmra.mxu0 %v476
          %v586 = vpop.f32.mrf.mxu0
          %v587 = vadd.f32 0.0, %v586
          %v588 = vpop.f32.mrf.mxu0
          %589 = vmatprep.mubr.f32.mxu0 0.0
          %590 = vmatmul.mubr.f32.gmra.mxu0 %v477
          %v591 = vpop.f32.mrf.mxu0
          %v592 = vadd.f32 0.0, %v591
          %v593 = vpop.f32.mrf.mxu0
          %594 = vmatprep.mubr.f32.mxu0 0.0
          %595 = vmatmul.mubr.f32.gmra.mxu0 %v478
          %v596 = vpop.f32.mrf.mxu0
          %v597 = vadd.f32 0.0, %v596
          %v598 = vpop.f32.mrf.mxu0
          %599 = vdwg.mxu0
          %v600 = vld [vmem:[#allocation2] sm:$0xff]
          %v601 = vld [vmem:[#allocation2 + $0x8] sm:$0xff]
          %v602 = vld [vmem:[#allocation2 + $0x10] sm:$0xff]
          %v603 = vld [vmem:[#allocation2 + $0x18] sm:$0xff]
          %v604 = vld [vmem:[#allocation2 + $0x20] sm:$0xff]
          %v605 = vld [vmem:[#allocation2 + $0x28] sm:$0xff]
          %v606 = vld [vmem:[#allocation2 + $0x30] sm:$0xff]
          %v607 = vld [vmem:[#allocation2 + $0x38] sm:$0xff]
          %vm608 = vcmask 130048
          %v610 = vsel %vm608, %v600, 0
          %v613 = vsel %vm608, %v601, 0
          %v616 = vsel %vm608, %v602, 0
          %v619 = vsel %vm608, %v603, 0
          %v622 = vsel %vm608, %v604, 0
          %v625 = vsel %vm608, %v605, 0
          %v628 = vsel %vm608, %v606, 0
          %v631 = vsel %vm608, %v607, 0
          %v634 = vsel %vm608, %v562, 0
          %v637 = vsel %vm608, %v567, 0
          %v640 = vsel %vm608, %v572, 0
          %v643 = vsel %vm608, %v577, 0
          %v646 = vsel %vm608, %v582, 0
          %v649 = vsel %vm608, %v587, 0
          %v652 = vsel %vm608, %v592, 0
          %v655 = vsel %vm608, %v597, 0
          %657 = vmatprep.subr.mxu0 0.0
          %658 = vmatpush1.xpose.msra.mxu0 0.0
          %659 = vmatprep.subr.mxu0 0.0
          %660 = vmatpush1.xpose.msra.mxu0 0.0
          %661 = vmatprep.subr.mxu0 0.0
          %662 = vmatpush1.xpose.msra.mxu0 0.0
          %663 = vmatprep.subr.mxu0 0.0
          %664 = vmatpush1.xpose.msra.mxu0 0.0
          %665 = vmatprep.subr.mxu0 0.0
          %666 = vmatpush1.xpose.msra.mxu0 0.0
          %667 = vmatprep.subr.mxu0 0.0
          %668 = vmatpush1.xpose.msra.mxu0 0.0
          %669 = vmatprep.subr.mxu0 0.0
          %670 = vmatpush1.xpose.msra.mxu0 0.0
          %671 = vmatprep.subr.mxu0 0.0
          %672 = vmatpush1.xpose.msra.mxu0 0.0
          %673 = vmatprep.subr.mxu0 0.0
          %674 = vmatpush1.xpose.msra.mxu0 %v655
          %675 = vmatprep.subr.mxu0 0.0
          %676 = vmatpush1.xpose.msra.mxu0 %v652
          %677 = vmatprep.subr.mxu0 0.0
          %678 = vmatpush1.xpose.msra.mxu0 %v649
          %679 = vmatprep.subr.mxu0 0.0
          %680 = vmatpush1.xpose.msra.mxu0 %v646
          %681 = vmatprep.subr.mxu0 0.0
          %682 = vmatpush1.xpose.msra.mxu0 %v643
          %683 = vmatprep.subr.mxu0 0.0
          %684 = vmatpush1.xpose.msra.mxu0 %v640
          %685 = vmatprep.subr.mxu0 0.0
          %686 = vmatpush1.xpose.msra.mxu0 %v637
          %687 = vmatprep.subr.mxu0 0.0
          %688 = vmatpush1.xpose.msra.mxu0 %v634
          %689 = vmatprep.subr.mxu0 0.0
          %690 = vmatpush2.xpose.msra.mxu0 0.0
          %691 = vmatprep.subr.mxu0 0.0
          %692 = vmatpush2.xpose.msra.mxu0 0.0
          %693 = vmatprep.subr.mxu0 0.0
          %694 = vmatpush2.xpose.msra.mxu0 0.0
          %695 = vmatprep.subr.mxu0 0.0
          %696 = vmatpush2.xpose.msra.mxu0 0.0
          %697 = vmatprep.subr.mxu0 0.0
          %698 = vmatpush2.xpose.msra.mxu0 0.0
          %699 = vmatprep.subr.mxu0 0.0
          %700 = vmatpush2.xpose.msra.mxu0 0.0
          %701 = vmatprep.subr.mxu0 0.0
          %702 = vmatpush2.xpose.msra.mxu0 0.0
          %703 = vmatprep.subr.mxu0 0.0
          %704 = vmatpush2.xpose.msra.mxu0 0.0
          %705 = vmatprep.subr.mxu0 0.0
          %706 = vmatpush2.xpose.msra.mxu0 0.0
          %707 = vmatprep.subr.mxu0 0.0
          %708 = vmatpush2.xpose.msra.mxu0 0.0
          %709 = vmatprep.subr.mxu0 0.0
          %710 = vmatpush2.xpose.msra.mxu0 0.0
          %711 = vmatprep.subr.mxu0 0.0
          %712 = vmatpush2.xpose.msra.mxu0 0.0
          %713 = vmatprep.subr.mxu0 0.0
          %714 = vmatpush2.xpose.msra.mxu0 0.0
          %715 = vmatprep.subr.mxu0 0.0
          %716 = vmatpush2.xpose.msra.mxu0 0.0
          %717 = vmatprep.subr.mxu0 0.0
          %718 = vmatpush2.xpose.msra.mxu0 0.0
          %719 = vmatprep.subr.mxu0 0.0
          %720 = vmatpush2.xpose.msra.mxu0 0.0
          %721 = vmatprep.mubr.f32.mxu0 0.0
          %722 = vmatmul.mubr.f32.gmra.mxu0 %v610
          %v723 = vpop.f32.mrf.mxu0
          %v724 = vadd.f32 0.0, %v723
          %v725 = vpop.f32.mrf.mxu0
          %726 = vmatprep.mubr.f32.mxu0 0.0
          %727 = vmatmul.mubr.f32.gmra.mxu0 %v613
          %v728 = vpop.f32.mrf.mxu0
          %v729 = vadd.f32 0.0, %v728
          %v730 = vpop.f32.mrf.mxu0
          %731 = vmatprep.mubr.f32.mxu0 0.0
          %732 = vmatmul.mubr.f32.gmra.mxu0 %v616
          %v733 = vpop.f32.mrf.mxu0
          %v734 = vadd.f32 0.0, %v733
          %v735 = vpop.f32.mrf.mxu0
          %736 = vmatprep.mubr.f32.mxu0 0.0
          %737 = vmatmul.mubr.f32.gmra.mxu0 %v619
          %v738 = vpop.f32.mrf.mxu0
          %v739 = vadd.f32 0.0, %v738
          %v740 = vpop.f32.mrf.mxu0
          %741 = vmatprep.mubr.f32.mxu0 0.0
          %742 = vmatmul.mubr.f32.gmra.mxu0 %v622
          %v743 = vpop.f32.mrf.mxu0
          %v744 = vadd.f32 0.0, %v743
          %v745 = vpop.f32.mrf.mxu0
          %746 = vmatprep.mubr.f32.mxu0 0.0
          %747 = vmatmul.mubr.f32.gmra.mxu0 %v625
          %v748 = vpop.f32.mrf.mxu0
          %v749 = vadd.f32 0.0, %v748
          %v750 = vpop.f32.mrf.mxu0
          %751 = vmatprep.mubr.f32.mxu0 0.0
          %752 = vmatmul.mubr.f32.gmra.mxu0 %v628
          %v753 = vpop.f32.mrf.mxu0
          %v754 = vadd.f32 0.0, %v753
          %v755 = vpop.f32.mrf.mxu0
          %756 = vmatprep.mubr.f32.mxu0 0.0
          %757 = vmatmul.mubr.f32.gmra.mxu0 %v631
          %v758 = vpop.f32.mrf.mxu0
          %v759 = vadd.f32 0.0, %v758
          %v760 = vpop.f32.mrf.mxu0
          %761 = vdwg.mxu0
          %v762 = vlaneseq
          %v763 = vshrl.u32 %v762, 7
          %v764 = vadd.s32 %v763, 8
          %v765 = vadd.s32 %v763, 16
          %v766 = vadd.s32 %v763, 24
          %v767 = vadd.s32 %v763, 32
          %v768 = vadd.s32 %v763, 40
          %v769 = vadd.s32 %v763, 48
          %v770 = vadd.s32 %v763, 56
          %v771 = vstv %s289
          %v772 = vadd.s32 %v771, %v763
          %v773 = vadd.s32 %v771, %v764
          %v774 = vadd.s32 %v771, %v765
          %v775 = vadd.s32 %v771, %v766
          %v776 = vadd.s32 %v771, %v767
          %v777 = vadd.s32 %v771, %v768
          %v778 = vadd.s32 %v771, %v769
          %v779 = vadd.s32 %v771, %v770
          %v780 = vlaneseq
          %v781 = vand.u32 %v780, 127
          %v782 = vstv %s290
          %v783 = vadd.s32 %v782, %v781
          %vm784 = vcmp.le.s32.totalorder %v783, %v772
          %vm785 = vcmp.le.s32.totalorder %v783, %v773
          %vm786 = vcmp.le.s32.totalorder %v783, %v774
          %vm787 = vcmp.le.s32.totalorder %v783, %v775
          %vm788 = vcmp.le.s32.totalorder %v783, %v776
          %vm789 = vcmp.le.s32.totalorder %v783, %v777
          %vm790 = vcmp.le.s32.totalorder %v783, %v778
          %vm791 = vcmp.le.s32.totalorder %v783, %v779
          %v792 = vsel %vm784, %v724, -inf
          %v793 = vsel %vm785, %v729, -inf
          %v794 = vsel %vm786, %v734, -inf
          %v795 = vsel %vm787, %v739, -inf
          %v796 = vsel %vm788, %v744, -inf
          %v797 = vsel %vm789, %v749, -inf
          %v798 = vsel %vm790, %v754, -inf
          %v799 = vsel %vm791, %v759, -inf
          %v800 = vld [vmem:[#allocation3] sm:$0xff]
          %v801 = vld [vmem:[#allocation3 + $0x8] sm:$0xff]
          %v802 = vld [vmem:[#allocation3 + $0x10] sm:$0xff]
          %v803 = vld [vmem:[#allocation3 + $0x18] sm:$0xff]
          %v804 = vld [vmem:[#allocation3 + $0x20] sm:$0xff]
          %v805 = vld [vmem:[#allocation3 + $0x28] sm:$0xff]
          %v806 = vld [vmem:[#allocation3 + $0x30] sm:$0xff]
          %v807 = vld [vmem:[#allocation3 + $0x38] sm:$0xff]
          %vm808 = vcmask 523264
          %v809 = vsel %vm808, %v792, -inf
          %810 = vmax.xlane.f32.xlu0 %v809
          %v811 = vpop.xlane.xlu0 %810
          %v812 = vsel %vm808, %v793, -inf
          %813 = vmax.xlane.f32.xlu0 %v812
          %v814 = vpop.xlane.xlu0 %813
          %v815 = vsel %vm808, %v794, -inf
          %816 = vmax.xlane.f32.xlu0 %v815
          %v817 = vpop.xlane.xlu0 %816
          %v818 = vsel %vm808, %v795, -inf
          %819 = vmax.xlane.f32.xlu0 %v818
          %v820 = vpop.xlane.xlu0 %819
          %v821 = vsel %vm808, %v796, -inf
          %822 = vmax.xlane.f32.xlu0 %v821
          %v823 = vpop.xlane.xlu0 %822
          %v824 = vsel %vm808, %v797, -inf
          %825 = vmax.xlane.f32.xlu0 %v824
          %v826 = vpop.xlane.xlu0 %825
          %v827 = vsel %vm808, %v798, -inf
          %828 = vmax.xlane.f32.xlu0 %v827
          %v829 = vpop.xlane.xlu0 %828
          %v830 = vsel %vm808, %v799, -inf
          %831 = vmax.xlane.f32.xlu0 %v830
          %v832 = vpop.xlane.xlu0 %831
          %v833 = vmax.f32 %v800, %v811
          %v834 = vmax.f32 %v801, %v814
          %v835 = vmax.f32 %v802, %v817
          %v836 = vmax.f32 %v803, %v820
          %v837 = vmax.f32 %v804, %v823
          %v838 = vmax.f32 %v805, %v826
          %v839 = vmax.f32 %v806, %v829
          %v840 = vmax.f32 %v807, %v832
          %v841 = vsub.f32 %v800, %v833
          %v842 = vsub.f32 %v801, %v834
          %v843 = vsub.f32 %v802, %v835
          %v844 = vsub.f32 %v803, %v836
          %v845 = vsub.f32 %v804, %v837
          %v846 = vsub.f32 %v805, %v838
          %v847 = vsub.f32 %v806, %v839
          %v848 = vsub.f32 %v807, %v840
          %v849 = vmul.f32 %v841, 1.442695
          %v850 = vpow.pop %v849
          %v851 = vmul.f32 %v842, 1.442695
          %v852 = vpow.pop %v851
          %v853 = vmul.f32 %v843, 1.442695
          %v854 = vpow.pop %v853
          %v855 = vmul.f32 %v844, 1.442695
          %v856 = vpow.pop %v855
          %v857 = vmul.f32 %v845, 1.442695
          %v858 = vpow.pop %v857
          %v859 = vmul.f32 %v846, 1.442695
          %v860 = vpow.pop %v859
          %v861 = vmul.f32 %v847, 1.442695
          %v862 = vpow.pop %v861
          %v863 = vmul.f32 %v848, 1.442695
          %v864 = vpow.pop %v863
          %866 = vset.pattern.permute.xlu0 0
          %867 = vperm.xlu0 %866, %v833
          %v868 = vpop.permute.xlu0 %867
          %871 = vset.pattern.permute.xlu0 0
          %872 = vperm.xlu0 %871, %v834
          %v873 = vpop.permute.xlu0 %872
          %876 = vset.pattern.permute.xlu0 0
          %877 = vperm.xlu0 %876, %v835
          %v878 = vpop.permute.xlu0 %877
          %881 = vset.pattern.permute.xlu0 0
          %882 = vperm.xlu0 %881, %v836
          %v883 = vpop.permute.xlu0 %882
          %886 = vset.pattern.permute.xlu0 0
          %887 = vperm.xlu0 %886, %v837
          %v888 = vpop.permute.xlu0 %887
          %891 = vset.pattern.permute.xlu0 0
          %892 = vperm.xlu0 %891, %v838
          %v893 = vpop.permute.xlu0 %892
          %896 = vset.pattern.permute.xlu0 0
          %897 = vperm.xlu0 %896, %v839
          %v898 = vpop.permute.xlu0 %897
          %901 = vset.pattern.permute.xlu0 0
          %902 = vperm.xlu0 %901, %v840
          %v903 = vpop.permute.xlu0 %902
          %v905 = vsub.f32 %v792, %v868
          %v906 = vsub.f32 %v793, %v873
          %v907 = vsub.f32 %v794, %v878
          %v908 = vsub.f32 %v795, %v883
          %v909 = vsub.f32 %v796, %v888
          %v910 = vsub.f32 %v797, %v893
          %v911 = vsub.f32 %v798, %v898
          %v912 = vsub.f32 %v799, %v903
          %v913 = vmul.f32 %v905, 1.442695
          %v914 = vpow.pop %v913
          %v915 = vmul.f32 %v906, 1.442695
          %v916 = vpow.pop %v915
          %v917 = vmul.f32 %v907, 1.442695
          %v918 = vpow.pop %v917
          %v919 = vmul.f32 %v908, 1.442695
          %v920 = vpow.pop %v919
          %v921 = vmul.f32 %v909, 1.442695
          %v922 = vpow.pop %v921
          %v923 = vmul.f32 %v910, 1.442695
          %v924 = vpow.pop %v923
          %v925 = vmul.f32 %v911, 1.442695
          %v926 = vpow.pop %v925
          %v927 = vmul.f32 %v912, 1.442695
          %v928 = vpow.pop %v927
          %v929 = vld [vmem:[#allocation4] sm:$0xff]
          %v930 = vld [vmem:[#allocation4 + $0x8] sm:$0xff]
          %v931 = vld [vmem:[#allocation4 + $0x10] sm:$0xff]
          %v932 = vld [vmem:[#allocation4 + $0x18] sm:$0xff]
          %v933 = vld [vmem:[#allocation4 + $0x20] sm:$0xff]
          %v934 = vld [vmem:[#allocation4 + $0x28] sm:$0xff]
          %v935 = vld [vmem:[#allocation4 + $0x30] sm:$0xff]
          %v936 = vld [vmem:[#allocation4 + $0x38] sm:$0xff]
          %v937 = vmul.f32 %v850, %v929
          %v938 = vmul.f32 %v852, %v930
          %v939 = vmul.f32 %v854, %v931
          %v940 = vmul.f32 %v856, %v932
          %v941 = vmul.f32 %v858, %v933
          %v942 = vmul.f32 %v860, %v934
          %v943 = vmul.f32 %v862, %v935
          %v944 = vmul.f32 %v864, %v936
          %v945 = vsel %vm808, %v914, 0.0
          %946 = vadd.xlane.f32.xlu0 %v945
          %v947 = vpop.xlane.xlu0 %946
          %v948 = vsel %vm808, %v916, 0.0
          %949 = vadd.xlane.f32.xlu0 %v948
          %v950 = vpop.xlane.xlu0 %949
          %v951 = vsel %vm808, %v918, 0.0
          %952 = vadd.xlane.f32.xlu0 %v951
          %v953 = vpop.xlane.xlu0 %952
          %v954 = vsel %vm808, %v920, 0.0
          %955 = vadd.xlane.f32.xlu0 %v954
          %v956 = vpop.xlane.xlu0 %955
          %v957 = vsel %vm808, %v922, 0.0
          %958 = vadd.xlane.f32.xlu0 %v957
          %v959 = vpop.xlane.xlu0 %958
          %v960 = vsel %vm808, %v924, 0.0
          %961 = vadd.xlane.f32.xlu0 %v960
          %v962 = vpop.xlane.xlu0 %961
          %v963 = vsel %vm808, %v926, 0.0
          %964 = vadd.xlane.f32.xlu0 %v963
          %v965 = vpop.xlane.xlu0 %964
          %v966 = vsel %vm808, %v928, 0.0
          %967 = vadd.xlane.f32.xlu0 %v966
          %v968 = vpop.xlane.xlu0 %967
          %v969 = vadd.f32 %v937, %v947
          %v970 = vadd.f32 %v938, %v950
          %v971 = vadd.f32 %v939, %v953
          %v972 = vadd.f32 %v940, %v956
          %v973 = vadd.f32 %v941, %v959
          %v974 = vadd.f32 %v942, %v962
          %v975 = vadd.f32 %v943, %v965
          %v976 = vadd.f32 %v944, %v968
          %vm977 = vcmask 7168
          %978 = vst.msk [vmem:[#allocation4] sm:$0xff] %vm977, %v969
          %979 = vst.msk [vmem:[#allocation4 + $0x8] sm:$0xff] %vm977, %v970
          %980 = vst.msk [vmem:[#allocation4 + $0x10] sm:$0xff] %vm977, %v971
          %981 = vst.msk [vmem:[#allocation4 + $0x18] sm:$0xff] %vm977, %v972
          %982 = vst.msk [vmem:[#allocation4 + $0x20] sm:$0xff] %vm977, %v973
          %983 = vst.msk [vmem:[#allocation4 + $0x28] sm:$0xff] %vm977, %v974
          %984 = vst.msk [vmem:[#allocation4 + $0x30] sm:$0xff] %vm977, %v975
          %985 = vst.msk [vmem:[#allocation4 + $0x38] sm:$0xff] %vm977, %v976
          %v986 = vld [vmem:[#allocation5] sm:$0xff]
          %v987 = vld [vmem:[#allocation5 + $0x8] sm:$0xff]
          %v988 = vld [vmem:[#allocation5 + $0x10] sm:$0xff]
          %v989 = vld [vmem:[#allocation5 + $0x18] sm:$0xff]
          %v990 = vld [vmem:[#allocation5 + $0x20] sm:$0xff]
          %v991 = vld [vmem:[#allocation5 + $0x28] sm:$0xff]
          %v992 = vld [vmem:[#allocation5 + $0x30] sm:$0xff]
          %v993 = vld [vmem:[#allocation5 + $0x38] sm:$0xff]
          %995 = vset.pattern.permute.xlu0 0
          %996 = vperm.xlu0 %995, %v850
          %v997 = vpop.permute.xlu0 %996
          %1000 = vset.pattern.permute.xlu0 0
          %1001 = vperm.xlu0 %1000, %v852
          %v1002 = vpop.permute.xlu0 %1001
          %1005 = vset.pattern.permute.xlu0 0
          %1006 = vperm.xlu0 %1005, %v854
          %v1007 = vpop.permute.xlu0 %1006
          %1010 = vset.pattern.permute.xlu0 0
          %1011 = vperm.xlu0 %1010, %v856
          %v1012 = vpop.permute.xlu0 %1011
          %1015 = vset.pattern.permute.xlu0 0
          %1016 = vperm.xlu0 %1015, %v858
          %v1017 = vpop.permute.xlu0 %1016
          %1020 = vset.pattern.permute.xlu0 0
          %1021 = vperm.xlu0 %1020, %v860
          %v1022 = vpop.permute.xlu0 %1021
          %1025 = vset.pattern.permute.xlu0 0
          %1026 = vperm.xlu0 %1025, %v862
          %v1027 = vpop.permute.xlu0 %1026
          %1030 = vset.pattern.permute.xlu0 0
          %1031 = vperm.xlu0 %1030, %v864
          %v1032 = vpop.permute.xlu0 %1031
          %v1034 = vmul.f32 %v997, %v986
          %v1035 = vmul.f32 %v1002, %v987
          %v1036 = vmul.f32 %v1007, %v988
          %v1037 = vmul.f32 %v1012, %v989
          %v1038 = vmul.f32 %v1017, %v990
          %v1039 = vmul.f32 %v1022, %v991
          %v1040 = vmul.f32 %v1027, %v992
          %v1041 = vmul.f32 %v1032, %v993
          %1042 = vrot.lane.b32.xlu0 %v562, 112
          %v1043 = vpop.permute.xlu0 %1042
          %1044 = vrot.lane.b32.xlu0 %v567, 112
          %v1045 = vpop.permute.xlu0 %1044
          %1046 = vrot.lane.b32.xlu0 %v572, 112
          %v1047 = vpop.permute.xlu0 %1046
          %1048 = vrot.lane.b32.xlu0 %v577, 112
          %v1049 = vpop.permute.xlu0 %1048
          %1050 = vrot.lane.b32.xlu0 %v582, 112
          %v1051 = vpop.permute.xlu0 %1050
          %1052 = vrot.lane.b32.xlu0 %v587, 112
          %v1053 = vpop.permute.xlu0 %1052
          %1054 = vrot.lane.b32.xlu0 %v592, 112
          %v1055 = vpop.permute.xlu0 %1054
          %1056 = vrot.lane.b32.xlu0 %v597, 112
          %v1057 = vpop.permute.xlu0 %1056
          %v1067 = vsel %vm808, %v914, 0
          %v1070 = vsel %vm808, %v916, 0
          %v1073 = vsel %vm808, %v918, 0
          %v1076 = vsel %vm808, %v920, 0
          %v1079 = vsel %vm808, %v922, 0
          %v1082 = vsel %vm808, %v924, 0
          %v1085 = vsel %vm808, %v926, 0
          %v1088 = vsel %vm808, %v928, 0
          %1090 = vmatprep.subr.mxu0 0.0
          %1091 = vmatpush1.msra.mxu0 0.0
          %1092 = vmatprep.subr.mxu0 0.0
          %1093 = vmatpush1.msra.mxu0 0.0
          %1094 = vmatprep.subr.mxu0 0.0
          %1095 = vmatpush1.msra.mxu0 0.0
          %1096 = vmatprep.subr.mxu0 0.0
          %1097 = vmatpush1.msra.mxu0 0.0
          %1098 = vmatprep.subr.mxu0 0.0
          %1099 = vmatpush1.msra.mxu0 0.0
          %1100 = vmatprep.subr.mxu0 0.0
          %1101 = vmatpush1.msra.mxu0 0.0
          %1102 = vmatprep.subr.mxu0 0.0
          %1103 = vmatpush1.msra.mxu0 0.0
          %1104 = vmatprep.subr.mxu0 0.0
          %1105 = vmatpush1.msra.mxu0 0.0
          %1106 = vmatprep.subr.mxu0 0.0
          %1107 = vmatpush1.msra.mxu0 %v1057
          %1108 = vmatprep.subr.mxu0 0.0
          %1109 = vmatpush1.msra.mxu0 %v1055
          %1110 = vmatprep.subr.mxu0 0.0
          %1111 = vmatpush1.msra.mxu0 %v1053
          %1112 = vmatprep.subr.mxu0 0.0
          %1113 = vmatpush1.msra.mxu0 %v1051
          %1114 = vmatprep.subr.mxu0 0.0
          %1115 = vmatpush1.msra.mxu0 %v1049
          %1116 = vmatprep.subr.mxu0 0.0
          %1117 = vmatpush1.msra.mxu0 %v1047
          %1118 = vmatprep.subr.mxu0 0.0
          %1119 = vmatpush1.msra.mxu0 %v1045
          %1120 = vmatprep.subr.mxu0 0.0
          %1121 = vmatpush1.msra.mxu0 %v1043
          %1122 = vmatprep.subr.mxu0 0.0
          %1123 = vmatpush2.msra.mxu0 0.0
          %1124 = vmatprep.subr.mxu0 0.0
          %1125 = vmatpush2.msra.mxu0 0.0
          %1126 = vmatprep.subr.mxu0 0.0
          %1127 = vmatpush2.msra.mxu0 0.0
          %1128 = vmatprep.subr.mxu0 0.0
          %1129 = vmatpush2.msra.mxu0 0.0
          %1130 = vmatprep.subr.mxu0 0.0
          %1131 = vmatpush2.msra.mxu0 0.0
          %1132 = vmatprep.subr.mxu0 0.0
          %1133 = vmatpush2.msra.mxu0 0.0
          %1134 = vmatprep.subr.mxu0 0.0
          %1135 = vmatpush2.msra.mxu0 0.0
          %1136 = vmatprep.subr.mxu0 0.0
          %1137 = vmatpush2.msra.mxu0 0.0
          %1138 = vmatprep.subr.mxu0 0.0
          %1139 = vmatpush2.msra.mxu0 0.0
          %1140 = vmatprep.subr.mxu0 0.0
          %1141 = vmatpush2.msra.mxu0 0.0
          %1142 = vmatprep.subr.mxu0 0.0
          %1143 = vmatpush2.msra.mxu0 0.0
          %1144 = vmatprep.subr.mxu0 0.0
          %1145 = vmatpush2.msra.mxu0 0.0
          %1146 = vmatprep.subr.mxu0 0.0
          %1147 = vmatpush2.msra.mxu0 0.0
          %1148 = vmatprep.subr.mxu0 0.0
          %1149 = vmatpush2.msra.mxu0 0.0
          %1150 = vmatprep.subr.mxu0 0.0
          %1151 = vmatpush2.msra.mxu0 0.0
          %1152 = vmatprep.subr.mxu0 0.0
          %1153 = vmatpush2.msra.mxu0 0.0
          %1154 = vmatprep.mubr.f32.mxu0 0.0
          %1155 = vmatmul.mubr.f32.gmra.mxu0 %v1067
          %v1156 = vpop.f32.mrf.mxu0
          %v1157 = vadd.f32 0.0, %v1156
          %v1158 = vpop.f32.mrf.mxu0
          %1159 = vmatprep.mubr.f32.mxu0 0.0
          %1160 = vmatmul.mubr.f32.gmra.mxu0 %v1070
          %v1161 = vpop.f32.mrf.mxu0
          %v1162 = vadd.f32 0.0, %v1161
          %v1163 = vpop.f32.mrf.mxu0
          %1164 = vmatprep.mubr.f32.mxu0 0.0
          %1165 = vmatmul.mubr.f32.gmra.mxu0 %v1073
          %v1166 = vpop.f32.mrf.mxu0
          %v1167 = vadd.f32 0.0, %v1166
          %v1168 = vpop.f32.mrf.mxu0
          %1169 = vmatprep.mubr.f32.mxu0 0.0
          %1170 = vmatmul.mubr.f32.gmra.mxu0 %v1076
          %v1171 = vpop.f32.mrf.mxu0
          %v1172 = vadd.f32 0.0, %v1171
          %v1173 = vpop.f32.mrf.mxu0
          %1174 = vmatprep.mubr.f32.mxu0 0.0
          %1175 = vmatmul.mubr.f32.gmra.mxu0 %v1079
          %v1176 = vpop.f32.mrf.mxu0
          %v1177 = vadd.f32 0.0, %v1176
          %v1178 = vpop.f32.mrf.mxu0
          %1179 = vmatprep.mubr.f32.mxu0 0.0
          %1180 = vmatmul.mubr.f32.gmra.mxu0 %v1082
          %v1181 = vpop.f32.mrf.mxu0
          %v1182 = vadd.f32 0.0, %v1181
          %v1183 = vpop.f32.mrf.mxu0
          %1184 = vmatprep.mubr.f32.mxu0 0.0
          %1185 = vmatmul.mubr.f32.gmra.mxu0 %v1085
          %v1186 = vpop.f32.mrf.mxu0
          %v1187 = vadd.f32 0.0, %v1186
          %v1188 = vpop.f32.mrf.mxu0
          %1189 = vmatprep.mubr.f32.mxu0 0.0
          %1190 = vmatmul.mubr.f32.gmra.mxu0 %v1088
          %v1191 = vpop.f32.mrf.mxu0
          %v1192 = vadd.f32 0.0, %v1191
          %v1193 = vpop.f32.mrf.mxu0
          %1194 = vdwg.mxu0
          %v1195 = vadd.f32 %v1034, %v1157
          %v1196 = vadd.f32 %v1035, %v1162
          %v1197 = vadd.f32 %v1036, %v1167
          %v1198 = vadd.f32 %v1037, %v1172
          %v1199 = vadd.f32 %v1038, %v1177
          %v1200 = vadd.f32 %v1039, %v1182
          %v1201 = vadd.f32 %v1040, %v1187
          %v1202 = vadd.f32 %v1041, %v1192
          %1203 = vst.msk [vmem:[#allocation5] sm:$0xff] %vm608, %v1195
          %1204 = vst.msk [vmem:[#allocation5 + $0x8] sm:$0xff] %vm608, %v1196
          %1205 = vst.msk [vmem:[#allocation5 + $0x10] sm:$0xff] %vm608, %v1197
          %1206 = vst.msk [vmem:[#allocation5 + $0x18] sm:$0xff] %vm608, %v1198
          %1207 = vst.msk [vmem:[#allocation5 + $0x20] sm:$0xff] %vm608, %v1199
          %1208 = vst.msk [vmem:[#allocation5 + $0x28] sm:$0xff] %vm608, %v1200
          %1209 = vst.msk [vmem:[#allocation5 + $0x30] sm:$0xff] %vm608, %v1201
          %1210 = vst.msk [vmem:[#allocation5 + $0x38] sm:$0xff] %vm608, %v1202
          %1211 = vst.msk [vmem:[#allocation3] sm:$0xff] %vm977, %v833
          %1212 = vst.msk [vmem:[#allocation3 + $0x8] sm:$0xff] %vm977, %v834
          %1213 = vst.msk [vmem:[#allocation3 + $0x10] sm:$0xff] %vm977, %v835
          %1214 = vst.msk [vmem:[#allocation3 + $0x18] sm:$0xff] %vm977, %v836
          %1215 = vst.msk [vmem:[#allocation3 + $0x20] sm:$0xff] %vm977, %v837
          %1216 = vst.msk [vmem:[#allocation3 + $0x28] sm:$0xff] %vm977, %v838
          %1217 = vst.msk [vmem:[#allocation3 + $0x30] sm:$0xff] %vm977, %v839
          %1218 = vst.msk [vmem:[#allocation3 + $0x38] sm:$0xff] %vm977, %v840
        $region48: #{tpu_custom_call.1} parent=35 // pred_fallthru
          _
        %p1219 = scmp.eq.s32.totalorder %s25, 1
        // Predicated region
        $region49: #{tpu_custom_call.1} parent=35 // pred_check
          %p1220 = pneg %p1219
        $region50: #{tpu_custom_call.1} parent=35 // pred_check_branch
          %1222 = sbr.rel (%p1220) target = $region52
        $region51: #{tpu_custom_call.1} parent=35 // pred_region
          %v1223 = vld [vmem:[#allocation4] sm:$0xff]
          %v1224 = vld [vmem:[#allocation4 + $0x8] sm:$0xff]
          %v1225 = vld [vmem:[#allocation4 + $0x10] sm:$0xff]
          %v1226 = vld [vmem:[#allocation4 + $0x18] sm:$0xff]
          %v1227 = vld [vmem:[#allocation4 + $0x20] sm:$0xff]
          %v1228 = vld [vmem:[#allocation4 + $0x28] sm:$0xff]
          %v1229 = vld [vmem:[#allocation4 + $0x30] sm:$0xff]
          %v1230 = vld [vmem:[#allocation4 + $0x38] sm:$0xff]
          %v1231 = vrcp.pop %v1223
          %v1232 = vrcp.pop %v1224
          %v1233 = vrcp.pop %v1225
          %v1234 = vrcp.pop %v1226
          %v1235 = vrcp.pop %v1227
          %v1236 = vrcp.pop %v1228
          %v1237 = vrcp.pop %v1229
          %v1238 = vrcp.pop %v1230
          %v1239 = vld [vmem:[#allocation5] sm:$0xff]
          %v1240 = vld [vmem:[#allocation5 + $0x8] sm:$0xff]
          %v1241 = vld [vmem:[#allocation5 + $0x10] sm:$0xff]
          %v1242 = vld [vmem:[#allocation5 + $0x18] sm:$0xff]
          %v1243 = vld [vmem:[#allocation5 + $0x20] sm:$0xff]
          %v1244 = vld [vmem:[#allocation5 + $0x28] sm:$0xff]
          %v1245 = vld [vmem:[#allocation5 + $0x30] sm:$0xff]
          %v1246 = vld [vmem:[#allocation5 + $0x38] sm:$0xff]
          %1248 = vset.pattern.permute.xlu0 0
          %1249 = vperm.xlu0 %1248, %v1231
          %v1250 = vpop.permute.xlu0 %1249
          %1253 = vset.pattern.permute.xlu0 0
          %1254 = vperm.xlu0 %1253, %v1232
          %v1255 = vpop.permute.xlu0 %1254
          %1258 = vset.pattern.permute.xlu0 0
          %1259 = vperm.xlu0 %1258, %v1233
          %v1260 = vpop.permute.xlu0 %1259
          %1263 = vset.pattern.permute.xlu0 0
          %1264 = vperm.xlu0 %1263, %v1234
          %v1265 = vpop.permute.xlu0 %1264
          %1268 = vset.pattern.permute.xlu0 0
          %1269 = vperm.xlu0 %1268, %v1235
          %v1270 = vpop.permute.xlu0 %1269
          %1273 = vset.pattern.permute.xlu0 0
          %1274 = vperm.xlu0 %1273, %v1236
          %v1275 = vpop.permute.xlu0 %1274
          %1278 = vset.pattern.permute.xlu0 0
          %1279 = vperm.xlu0 %1278, %v1237
          %v1280 = vpop.permute.xlu0 %1279
          %1283 = vset.pattern.permute.xlu0 0
          %1284 = vperm.xlu0 %1283, %v1238
          %v1285 = vpop.permute.xlu0 %1284
          %v1287 = vmul.f32 %v1239, %v1250
          %v1288 = vmul.f32 %v1240, %v1255
          %v1289 = vmul.f32 %v1241, %v1260
          %v1290 = vmul.f32 %v1242, %v1265
          %v1291 = vmul.f32 %v1243, %v1270
          %v1292 = vmul.f32 %v1244, %v1275
          %v1293 = vmul.f32 %v1245, %v1280
          %v1294 = vmul.f32 %v1246, %v1285
          %vm1295 = vcmask 130048
          %1296 = vst.msk [vmem:[%s287] sm:$0xff] %vm1295, %v1287
          %1297 = vst.msk [vmem:[%s287 + $0x8] sm:$0xff] %vm1295, %v1288
          %1298 = vst.msk [vmem:[%s287 + $0x10] sm:$0xff] %vm1295, %v1289
          %1299 = vst.msk [vmem:[%s287 + $0x18] sm:$0xff] %vm1295, %v1290
          %1300 = vst.msk [vmem:[%s287 + $0x20] sm:$0xff] %vm1295, %v1291
          %1301 = vst.msk [vmem:[%s287 + $0x28] sm:$0xff] %vm1295, %v1292
          %1302 = vst.msk [vmem:[%s287 + $0x30] sm:$0xff] %vm1295, %v1293
          %1303 = vst.msk [vmem:[%s287 + $0x38] sm:$0xff] %vm1295, %v1294
        $region52: #{tpu_custom_call.1} parent=35 // pred_fallthru
          _
        %s1304 = smul.u32 8, %s24
        %p1305 = scmp.lt.s32.totalorder %s23, 1
        %s1306 = scalar_select %p1305, %s23, 1
        %p1307 = scmp.lt.s32.totalorder %s1304, 15
        %s1308 = scalar_select %p1307, %s1304, 15
        %s1309 = smul.addr %s1306, 16
        %s1310 = sadd.s32 %s1308, %s1309
        %s1311 = smul.addr %s1310, 8
        %s1312 = scalar_lea.vmem %s4, %s1311
        // Predicated region
        $region53: #{tpu_custom_call.1} parent=35 // pred_check
          %p1313 = pneg %p155
        $region54: #{tpu_custom_call.1} parent=35 // pred_check_branch
          %1315 = sbr.rel (%p1313) target = $region56
        $region55: #{tpu_custom_call.1} parent=35 // pred_region
          %s1316 = smul.u32 8, %s24
        $region56: #{tpu_custom_call.1} parent=35 // pred_fallthru
          _
      $region36: #{tpu_custom_call.1} parent=5 // pred_fallthru
        _
      %p1317 = scmp.le.s32.totalorder 2, %s13
      // Predicated region
      $region57: #{tpu_custom_call.1} parent=5 // pred_check
        %p1318 = pneg %p1317
      $region58: #{tpu_custom_call.1} parent=5 // pred_check_branch
        %1320 = sbr.rel (%p1318) target = $region60
      $region59: #{tpu_custom_call.1} parent=5 // pred_region
        %s1321 = ssub.s32 %s13, 2
        // Predicated region
        $region61: #{tpu_custom_call.1} parent=59 // pred_check
          %p1322 = pneg %p161
        $region62: #{tpu_custom_call.1} parent=59 // pred_check_branch
          %1324 = sbr.rel (%p1322) target = $region64
        $region63: #{tpu_custom_call.1} parent=59 // pred_region
          %s1325 = smul.u32 8, %s27
          %p1326 = scmp.lt.s32.totalorder %s26, 1
          %s1327 = scalar_select %p1326, %s26, 1
          %p1328 = scmp.lt.s32.totalorder %s1325, 15
          %s1329 = scalar_select %p1328, %s1325, 15
          %s1330 = smul.addr %s1327, 16
          %s1331 = sadd.s32 %s1329, %s1330
          %s1332 = smul.addr %s1331, 8
          %s1333 = scalar_lea.vmem %s4, %s1332
        $region64: #{tpu_custom_call.1} parent=59 // pred_fallthru
          _
      $region60: #{tpu_custom_call.1} parent=5 // pred_fallthru
        _
    $region6: #{tpu_custom_call.1} parent=1 // loop_footer
      %s17 = sadd.s32 1, %s13
    $region7: #{tpu_custom_call.1} parent=1 // loop_footer_branch
      %12 = sbr.rel target = $region3
    $region8: #{tpu_custom_call.1} parent=1 // loop_exit
      _
    %1334 = vsyncpa [#allocation7], 1
    %s1335 = scalar_lea.sflag [#allocation7], 1
    %1336 = vsyncpa %s1335, 1

</llo_original>
